<compile_context>
chip_gen: v7x
topology: tpu7x:2x2x1
jax: 0.10.0
libtpu: 0.0.40
codegen_flags: <defaults>
</compile_context>

<pallas_src>
import jax
import jax.numpy as jnp
from jax.experimental import pallas as pl
from jax.experimental.pallas import tpu as pltpu

EPS = 1e-6

_MIN_KERNEL_ELEMENTS = 1 << 18   # below this, plain XLA fusion wins over a kernel launch
_CHUNK_F32_BYTES = 1 << 20       # ~1 MiB of f32 rows per inner-loop chunk


def _vmem_capacity_bytes():
    """Physical VMEM per TensorCore; conservative (v7x-sized) fallback if unqueryable."""
    try:
        return int(pltpu.get_tpu_info().vmem_capacity_bytes)
    except Exception:
        return 64 * 1024 * 1024


def _choose_tiling(B, D, itemsize):
    """Return (row_tile, chunk_rows, n_chunks, vmem_limit) or None for the XLA fallback."""
    vmem = _vmem_capacity_bytes()
    if vmem >= 128 * 1024 * 1024:            # v5e / v6e: 128 MiB physical VMEM
        block_budget = 8 * 1024 * 1024       # per-input block; 2 inputs x 2 bufs = 32 MiB
        vmem_limit = 64 * 1024 * 1024
    else:                                    # v7x (64 MiB/TC) or unknown
        block_budget = 4 * 1024 * 1024       # 2 x 2 x 4 MiB = 16 MiB + bounded temps
        vmem_limit = 48 * 1024 * 1024

    row_bytes = D * itemsize
    if 8 * row_bytes > block_budget:         # even a minimal 8-row block blows the budget
        return None

    max_rows = max(8, (block_budget // row_bytes) // 8 * 8)
    padded_b = ((B + 7) // 8) * 8
    row_tile = min(max_rows, padded_b)

    # Inner-loop chunk: ~1 MiB of f32 per temporary, multiple of 8 rows, <= row_tile.
    chunk_rows = max(8, min(row_tile, (_CHUNK_F32_BYTES // (D * 4)) // 8 * 8))
    row_tile = max(chunk_rows, (row_tile // chunk_rows) * chunk_rows)
    n_chunks = row_tile // chunk_rows
    return row_tile, chunk_rows, n_chunks, vmem_limit


def _make_kernel(total_rows, row_tile, chunk_rows, n_chunks, feat, mask_needed):
    def kernel(x1_ref, x2_ref, partial_ref):
        i = pl.program_id(0)

        @pl.when(i == 0)
        def _():
            partial_ref[...] = jnp.zeros_like(partial_ref)

        def body(s, acc):
            start = pl.multiple_of(s * chunk_rows, chunk_rows)
            x1 = x1_ref[pl.ds(start, chunk_rows), :].astype(jnp.float32)
            x2 = x2_ref[pl.ds(start, chunk_rows), :].astype(jnp.float32)
            d = x1 - x2 + EPS
            d2 = d * d
            if mask_needed:
                # Global row index of each row in this chunk; zero padded rows of the
                # ragged last block *before* folding (eps^2 must not leak into the sum).
                row = (i * row_tile + s * chunk_rows
                       + jax.lax.broadcasted_iota(jnp.int32, (chunk_rows, 1), 0))
                d2 = jnp.where(row < total_rows, d2, 0.0)
            # Fold the chunk rows onto 8 sublanes: pure VPU adds, no cross-lane traffic.
            return acc + jnp.sum(d2.reshape(chunk_rows // 8, 8, feat), axis=0)

        acc = jax.lax.fori_loop(
            0, n_chunks, body, jnp.zeros((8, feat), jnp.float32), unroll=True)
        partial_ref[...] += acc

    return kernel


def _reference(output1, output2):
    x1 = output1.astype(jnp.float32)
    x2 = output2.astype(jnp.float32)
    d2 = jnp.sum((x1 - x2 + EPS) ** 2, axis=-1)  # squared pairwise distance
    return jnp.mean(d2) / output1.shape[0]


def auxiliary_loss(output1, output2):
    assert output1.shape == output2.shape and output1.ndim == 2
    B, D = output1.shape

    # Tiny inputs: launch overhead >> work, the fused XLA path wins. Same math.
    if B * D < _MIN_KERNEL_ELEMENTS:
        return _reference(output1, output2)

    itemsize = jnp.dtype(output1.dtype).itemsize
    tiling = _choose_tiling(B, D, itemsize)
    if tiling is None:  # pathological D: a single 8-row block would not fit the budget
        return _reference(output1, output2)
    row_tile, chunk_rows, n_chunks, vmem_limit = tiling

    num_blocks = (B + row_tile - 1) // row_tile
    mask_needed = (B % row_tile) != 0

    kernel = _make_kernel(B, row_tile, chunk_rows, n_chunks, D, mask_needed)

    partials = pl.pallas_call(
        kernel,
        out_shape=jax.ShapeDtypeStruct((8, D), jnp.float32),
        grid_spec=pltpu.PrefetchScalarGridSpec(
            num_scalar_prefetch=0,
            grid=(num_blocks,),
            in_specs=[
                pl.BlockSpec((row_tile, D), lambda i: (i, 0)),
                pl.BlockSpec((row_tile, D), lambda i: (i, 0)),
            ],
            out_specs=pl.BlockSpec((8, D), lambda i: (0, 0)),
        ),
        compiler_params=pltpu.CompilerParams(
            dimension_semantics=("arbitrary",),   # resident accumulator across the grid
            vmem_limit_bytes=vmem_limit,
        ),
        cost_estimate=pl.CostEstimate(
            flops=3 * B * D,
            transcendentals=0,
            bytes_accessed=2 * B * D * itemsize + 8 * D * 4,
        ),
    )(output1, output2)

    # mean over rows (/B), then the module divides by batch size (/B) again -> /B^2
    return jnp.sum(partials) / jnp.float32(B * B)


if __name__ == "__main__":
    key = jax.random.PRNGKey(0)
    k1, k2, k3, k4, k5, k6, k7, k8 = jax.random.split(key, 8)

    # Small shape consistent with the module (pairs of embeddings fed to
    # F.pairwise_distance); exercises the small-input fallback path.
    o1s = jax.random.normal(k1, (16, 32), dtype=jnp.float32)
    o2s = jax.random.normal(k2, (16, 32), dtype=jnp.float32)
    loss_small = auxiliary_loss(o1s, o2s)
    jax.block_until_ready(loss_small)
    assert jnp.allclose(loss_small, _reference(o1s, o2s), rtol=1e-5, atol=1e-6)

    # Kernel path, batch divides the tile evenly.
    o1 = jax.random.normal(k3, (1024, 256), dtype=jnp.float32)
    o2 = jax.random.normal(k4, (1024, 256), dtype=jnp.float32)
    loss = auxiliary_loss(o1, o2)
    jax.block_until_ready(loss)
    assert jnp.allclose(loss, _reference(o1, o2), rtol=1e-4, atol=1e-6)

    # Kernel path, ragged batch (B not a multiple of the tile or of 8) with a feature
    # dim that is not a multiple of 128: exercises the in-kernel row masking.
    o1r = jax.random.normal(k5, (999, 300), dtype=jnp.float32)
    o2r = jax.random.normal(k6, (999, 300), dtype=jnp.float32)
    loss_r = auxiliary_loss(o1r, o2r)
    jax.block_until_ready(loss_r)
    assert jnp.allclose(loss_r, _reference(o1r, o2r), rtol=1e-4, atol=1e-6)

    # Kernel path with bf16 inputs (cast to f32 inside the kernel).
    o1b = jax.random.normal(k7, (512, 512), dtype=jnp.bfloat16)
    o2b = jax.random.normal(k8, (512, 512), dtype=jnp.bfloat16)
    loss_b = auxiliary_loss(o1b, o2b)
    jax.block_until_ready(loss_b)
    assert jnp.allclose(loss_b, _reference(o1b, o2b), rtol=1e-3, atol=1e-6)

    print("KERNEL_OK")
</pallas_src>

<mosaic_0001>
module attributes {stable_mosaic.version = 11 : i64} {
  func.func @kernel(%arg0: i32, %arg1: memref<1024x256xf32, #tpu.memory_space<vmem>>, %arg2: memref<1024x256xf32, #tpu.memory_space<vmem>>, %arg3: memref<8x256xf32, #tpu.memory_space<vmem>>) attributes {dimension_semantics = [#tpu.dimension_semantics<arbitrary>], iteration_bounds = array<i64: 1>, scalar_prefetch = 0 : i64, scratch_operands = 0 : i64, tpu.core_type = #tpu.core_type<tc>, window_params = [{transform_indices = @transform_0, window_bounds = array<i64: 1024, 256>}, {transform_indices = @transform_1, window_bounds = array<i64: 1024, 256>}, {pipeline_mode = #tpu.pipeline_mode<synchronous>, transform_indices = @transform_2, window_bounds = array<i64: 8, 256>}]} {
    %c0_i32 = arith.constant 0 : i32
    %0 = arith.cmpi eq, %arg0, %c0_i32 : i32
    %1 = arith.extui %0 : i1 to i32
    %c0_i32_0 = arith.constant 0 : i32
    %2 = arith.cmpi ne, %1, %c0_i32_0 : i32
    scf.if %2 {
      %cst_9 = arith.constant 0.000000e+00 : f32
      %20 = vector.broadcast %cst_9 : f32 to vector<8x256xf32>
      %c0_10 = arith.constant 0 : index
      %c0_11 = arith.constant 0 : index
      %21 = vector.load %arg3[%c0_10, %c0_11] : memref<8x256xf32, #tpu.memory_space<vmem>>, vector<8x256xf32>
      tpu.vector_store %arg3[%c0_10, %c0_11], %20 {strides = array<i32>} : memref<8x256xf32, #tpu.memory_space<vmem>>, vector<8x256xf32>,
    } else {
    }
    %cst = arith.constant 0.000000e+00 : f32
    %3 = vector.broadcast %cst : f32 to vector<8x256xf32>
    %c0_i32_1 = arith.constant 0 : i32
    %c1024_i32 = arith.constant 1024 : i32
    %4 = arith.muli %c0_i32_1, %c1024_i32 : i32
    %5 = tpu.assume_multiple %4, 1024 : i32
    %6 = arith.index_cast %5 : i32 to index
    %c0 = arith.constant 0 : index
    %7 = vector.load %arg1[%6, %c0] : memref<1024x256xf32, #tpu.memory_space<vmem>>, vector<1024x256xf32>
    %8 = arith.index_cast %5 : i32 to index
    %c0_2 = arith.constant 0 : index
    %9 = vector.load %arg2[%8, %c0_2] : memref<1024x256xf32, #tpu.memory_space<vmem>>, vector<1024x256xf32>
    %10 = arith.subf %7, %9 : vector<1024x256xf32>
    %cst_3 = arith.constant 9.99999997E-7 : f32
    %11 = vector.broadcast %cst_3 : f32 to vector<1024x256xf32>
    %12 = arith.addf %10, %11 : vector<1024x256xf32>
    %13 = arith.mulf %12, %12 : vector<1024x256xf32>
    %14 = vector.shape_cast %13 : vector<1024x256xf32> to vector<128x8x256xf32>
    %cst_4 = arith.constant dense<0.000000e+00> : vector<8x256xf32>
    %15 = vector.multi_reduction <add>, %14, %cst_4 [0] : vector<128x8x256xf32> to vector<8x256xf32>
    %16 = arith.addf %3, %15 : vector<8x256xf32>
    %c1_i32 = arith.constant 1 : i32
    %c0_5 = arith.constant 0 : index
    %c0_6 = arith.constant 0 : index
    %17 = vector.load %arg3[%c0_5, %c0_6] : memref<8x256xf32, #tpu.memory_space<vmem>>, vector<8x256xf32>
    %18 = arith.addf %17, %16 : vector<8x256xf32>
    %c0_7 = arith.constant 0 : index
    %c0_8 = arith.constant 0 : index
    %19 = vector.load %arg3[%c0_7, %c0_8] : memref<8x256xf32, #tpu.memory_space<vmem>>, vector<8x256xf32>
    tpu.vector_store %arg3[%c0_7, %c0_8], %18 {strides = array<i32>} : memref<8x256xf32, #tpu.memory_space<vmem>>, vector<8x256xf32>,
    return
  }
  func.func @transform_0(%arg0: i32) -> (i32, i32) {
    %c0_i32 = arith.constant 0 : i32
    %c0_i32_0 = arith.constant 0 : i32
    return %arg0, %c0_i32 : i32, i32
  }
  func.func @transform_1(%arg0: i32) -> (i32, i32) {
    %c0_i32 = arith.constant 0 : i32
    %c0_i32_0 = arith.constant 0 : i32
    return %arg0, %c0_i32 : i32, i32
  }
  func.func @transform_2(%arg0: i32) -> (i32, i32) {
    %c0_i32 = arith.constant 0 : i32
    %c0_i32_0 = arith.constant 0 : i32
    %c0_i32_1 = arith.constant 0 : i32
    return %c0_i32, %c0_i32_0 : i32, i32
  }
}

</mosaic_0001>

<llo_original>
// kernel: tpu_custom_call.1
$region0: #{tpu_custom_call.1}
  #allocation0 [shape = 'u32[]', space=smem, size = 0x4, offset = 0x4, fixed_abs, tag = 'smem constant byte address 0x4 - core index']
  #allocation1 [shape = 'u32[144,128]{1,0:T(1,128)}', space=vmem, size = 0x12000, scoped, tag = 'internal scratch']
  %s0 = inlined_call_operand.hbm [shape: f32[1024,256], index: 0, kind: input, shape index: {}]
  %s1 = inlined_call_operand.hbm [shape: f32[1024,256], index: 1, kind: input, shape index: {}]
  %s2 = inlined_call_operand.hbm [shape: f32[8,256], index: 2, kind: output, shape index: {}]
  %s3 = sld [smem:[#allocation0]]
  $region30: #{tpu_custom_call.1} parent=0
    _
  %s5 = ssub.s32 1, %s3
  %s6 = scalar_select 0, %s5, %s3
  $region1: #{tpu_custom_call.1} parent=0
    #allocation2 [shape = 'u8[1048576]{0}', space=vmem, size = 0x100000, scoped, tag = 'input window, operand 0, single buffered']
    #allocation3 [shape = 's32[1]{0}', space=sflag, size = 0x4, scoped, tag = 'scoped memory for tpu_custom_call.1']
    #allocation4 [shape = 's32[1]{0}', space=sflag, size = 0x4, scoped, tag = 'scoped memory for tpu_custom_call.1']
    #allocation5 [shape = 'u8[1048576]{0}', space=vmem, size = 0x100000, scoped, tag = 'input window, operand 1, single buffered']
    #allocation6 [shape = 's32[1]{0}', space=sflag, size = 0x4, scoped, tag = 'scoped memory for tpu_custom_call.1']
    #allocation7 [shape = 'u8[8192]{0}', space=vmem, size = 0x2000, scoped, tag = 'output window, operand 0, single buffered']
    %7 = vsyncpa [#allocation3], 0
    %8 = vsyncpa [#allocation6], 0
    %9 = vsyncpa [#allocation4], 0
    // Predicated region
    $region2: #{tpu_custom_call.1} parent=1 // pred_check
      _
    $region3: #{tpu_custom_call.1} parent=1 // pred_check_branch
      %11 = sbr.rel (0) target = $region5
    $region4: #{tpu_custom_call.1} parent=1 // pred_region
      %s13 = ssub.s32 32768, 32768
      %14 = vsyncadd [#allocation3], %s13
      %s15 = sshll.u32 [#allocation2], 4
      %s16 = int_to_ptr.vmem [resolvable:$true] %s15
      %21 = dma.hbm_to_vmem [thread:$0]  %s0, 32768, %s16, [#allocation3], 256, 256, 16
    $region5: #{tpu_custom_call.1} parent=1 // pred_fallthru
      _
    // Predicated region
    $region6: #{tpu_custom_call.1} parent=1 // pred_check
      _
    $region7: #{tpu_custom_call.1} parent=1 // pred_check_branch
      %23 = sbr.rel (0) target = $region9
    $region8: #{tpu_custom_call.1} parent=1 // pred_region
      %s25 = ssub.s32 32768, 32768
      %26 = vsyncadd [#allocation6], %s25
      %s27 = sshll.u32 [#allocation5], 4
      %s28 = int_to_ptr.vmem [resolvable:$true] %s27
      %33 = dma.hbm_to_vmem [thread:$0]  %s1, 32768, %s28, [#allocation6], 256, 256, 16
    $region9: #{tpu_custom_call.1} parent=1 // pred_fallthru
      _
    // Predicated region
    $region10: #{tpu_custom_call.1} parent=1 // pred_check
      _
    $region11: #{tpu_custom_call.1} parent=1 // pred_check_branch
      %35 = sbr.rel (0) target = $region13
    $region12: #{tpu_custom_call.1} parent=1 // pred_region
      %36 = dma.done [#allocation3], 32768
    $region13: #{tpu_custom_call.1} parent=1 // pred_fallthru
      _
    // Predicated region
    $region14: #{tpu_custom_call.1} parent=1 // pred_check
      _
    $region15: #{tpu_custom_call.1} parent=1 // pred_check_branch
      %38 = sbr.rel (0) target = $region17
    $region16: #{tpu_custom_call.1} parent=1 // pred_region
      %39 = dma.done [#allocation6], 32768
    $region17: #{tpu_custom_call.1} parent=1 // pred_fallthru
      _
    %p40 = scmp.eq.s32.totalorder 0, 0
    // Predicated region
    $region18: #{tpu_custom_call.1} parent=1 // pred_check
      %p41 = pneg %p40
    $region19: #{tpu_custom_call.1} parent=1 // pred_check_branch
      %43 = sbr.rel (%p41) target = $region21
    $region20: #{tpu_custom_call.1} parent=1 // pred_region
      %44 = vst [vmem:[#allocation7] sm:$0xff] 0.0
      %45 = vst [vmem:[#allocation7 + $0x8] sm:$0xff] 0.0
    $region21: #{tpu_custom_call.1} parent=1 // pred_fallthru
      _
    %s46 = smul.u32 0, 2
    %s47 = smul.addr %s46, 8
    %s48 = scalar_lea.vmem [#allocation2], %s47
    %v49 = vld [vmem:[%s48] sm:$0xff]
    %v50 = vld [vmem:[%s48 + $0x8] sm:$0xff]
    %v51 = vld [vmem:[%s48 + $0x10] sm:$0xff]
    %v52 = vld [vmem:[%s48 + $0x18] sm:$0xff]
    %v53 = vld [vmem:[%s48 + $0x20] sm:$0xff]
    %v54 = vld [vmem:[%s48 + $0x28] sm:$0xff]
    %v55 = vld [vmem:[%s48 + $0x30] sm:$0xff]
    %v56 = vld [vmem:[%s48 + $0x38] sm:$0xff]
    %v57 = vld [vmem:[%s48 + $0x40] sm:$0xff]
    %v58 = vld [vmem:[%s48 + $0x48] sm:$0xff]
    %v59 = vld [vmem:[%s48 + $0x50] sm:$0xff]
    %v60 = vld [vmem:[%s48 + $0x58] sm:$0xff]
    %v61 = vld [vmem:[%s48 + $0x60] sm:$0xff]
    %v62 = vld [vmem:[%s48 + $0x68] sm:$0xff]
    %v63 = vld [vmem:[%s48 + $0x70] sm:$0xff]
    %v64 = vld [vmem:[%s48 + $0x78] sm:$0xff]
    %v65 = vld [vmem:[%s48 + $0x80] sm:$0xff]
    %v66 = vld [vmem:[%s48 + $0x88] sm:$0xff]
    %v67 = vld [vmem:[%s48 + $0x90] sm:$0xff]
    %v68 = vld [vmem:[%s48 + $0x98] sm:$0xff]
    %v69 = vld [vmem:[%s48 + $0xa0] sm:$0xff]
    %v70 = vld [vmem:[%s48 + $0xa8] sm:$0xff]
    %v71 = vld [vmem:[%s48 + $0xb0] sm:$0xff]
    %v72 = vld [vmem:[%s48 + $0xb8] sm:$0xff]
    %v73 = vld [vmem:[%s48 + $0xc0] sm:$0xff]
    %v74 = vld [vmem:[%s48 + $0xc8] sm:$0xff]
    %v75 = vld [vmem:[%s48 + $0xd0] sm:$0xff]
    %v76 = vld [vmem:[%s48 + $0xd8] sm:$0xff]
    %v77 = vld [vmem:[%s48 + $0xe0] sm:$0xff]
    %v78 = vld [vmem:[%s48 + $0xe8] sm:$0xff]
    %v79 = vld [vmem:[%s48 + $0xf0] sm:$0xff]
    %v80 = vld [vmem:[%s48 + $0xf8] sm:$0xff]
    %v81 = vld [vmem:[%s48 + $0x100] sm:$0xff]
    %v82 = vld [vmem:[%s48 + $0x108] sm:$0xff]
    %v83 = vld [vmem:[%s48 + $0x110] sm:$0xff]
    %v84 = vld [vmem:[%s48 + $0x118] sm:$0xff]
    %v85 = vld [vmem:[%s48 + $0x120] sm:$0xff]
    %v86 = vld [vmem:[%s48 + $0x128] sm:$0xff]
    %v87 = vld [vmem:[%s48 + $0x130] sm:$0xff]
    %v88 = vld [vmem:[%s48 + $0x138] sm:$0xff]
    %v89 = vld [vmem:[%s48 + $0x140] sm:$0xff]
    %v90 = vld [vmem:[%s48 + $0x148] sm:$0xff]
    %v91 = vld [vmem:[%s48 + $0x150] sm:$0xff]
    %v92 = vld [vmem:[%s48 + $0x158] sm:$0xff]
    %v93 = vld [vmem:[%s48 + $0x160] sm:$0xff]
    %v94 = vld [vmem:[%s48 + $0x168] sm:$0xff]
    %v95 = vld [vmem:[%s48 + $0x170] sm:$0xff]
    %v96 = vld [vmem:[%s48 + $0x178] sm:$0xff]
    %v97 = vld [vmem:[%s48 + $0x180] sm:$0xff]
    %v98 = vld [vmem:[%s48 + $0x188] sm:$0xff]
    %v99 = vld [vmem:[%s48 + $0x190] sm:$0xff]
    %v100 = vld [vmem:[%s48 + $0x198] sm:$0xff]
    %v101 = vld [vmem:[%s48 + $0x1a0] sm:$0xff]
    %v102 = vld [vmem:[%s48 + $0x1a8] sm:$0xff]
    %v103 = vld [vmem:[%s48 + $0x1b0] sm:$0xff]
    %v104 = vld [vmem:[%s48 + $0x1b8] sm:$0xff]
    %v105 = vld [vmem:[%s48 + $0x1c0] sm:$0xff]
    %v106 = vld [vmem:[%s48 + $0x1c8] sm:$0xff]
    %v107 = vld [vmem:[%s48 + $0x1d0] sm:$0xff]
    %v108 = vld [vmem:[%s48 + $0x1d8] sm:$0xff]
    %v109 = vld [vmem:[%s48 + $0x1e0] sm:$0xff]
    %v110 = vld [vmem:[%s48 + $0x1e8] sm:$0xff]
    %v111 = vld [vmem:[%s48 + $0x1f0] sm:$0xff]
    %v112 = vld [vmem:[%s48 + $0x1f8] sm:$0xff]
    %v113 = vld [vmem:[%s48 + $0x200] sm:$0xff]
    %v114 = vld [vmem:[%s48 + $0x208] sm:$0xff]
    %v115 = vld [vmem:[%s48 + $0x210] sm:$0xff]
    %v116 = vld [vmem:[%s48 + $0x218] sm:$0xff]
    %v117 = vld [vmem:[%s48 + $0x220] sm:$0xff]
    %v118 = vld [vmem:[%s48 + $0x228] sm:$0xff]
    %v119 = vld [vmem:[%s48 + $0x230] sm:$0xff]
    %v120 = vld [vmem:[%s48 + $0x238] sm:$0xff]
    %v121 = vld [vmem:[%s48 + $0x240] sm:$0xff]
    %v122 = vld [vmem:[%s48 + $0x248] sm:$0xff]
    %v123 = vld [vmem:[%s48 + $0x250] sm:$0xff]
    %v124 = vld [vmem:[%s48 + $0x258] sm:$0xff]
    %v125 = vld [vmem:[%s48 + $0x260] sm:$0xff]
    %v126 = vld [vmem:[%s48 + $0x268] sm:$0xff]
    %v127 = vld [vmem:[%s48 + $0x270] sm:$0xff]
    %v128 = vld [vmem:[%s48 + $0x278] sm:$0xff]
    %v129 = vld [vmem:[%s48 + $0x280] sm:$0xff]
    %v130 = vld [vmem:[%s48 + $0x288] sm:$0xff]
    %v131 = vld [vmem:[%s48 + $0x290] sm:$0xff]
    %v132 = vld [vmem:[%s48 + $0x298] sm:$0xff]
    %v133 = vld [vmem:[%s48 + $0x2a0] sm:$0xff]
    %v134 = vld [vmem:[%s48 + $0x2a8] sm:$0xff]
    %v135 = vld [vmem:[%s48 + $0x2b0] sm:$0xff]
    %v136 = vld [vmem:[%s48 + $0x2b8] sm:$0xff]
    %v137 = vld [vmem:[%s48 + $0x2c0] sm:$0xff]
    %v138 = vld [vmem:[%s48 + $0x2c8] sm:$0xff]
    %v139 = vld [vmem:[%s48 + $0x2d0] sm:$0xff]
    %v140 = vld [vmem:[%s48 + $0x2d8] sm:$0xff]
    %v141 = vld [vmem:[%s48 + $0x2e0] sm:$0xff]
    %v142 = vld [vmem:[%s48 + $0x2e8] sm:$0xff]
    %v143 = vld [vmem:[%s48 + $0x2f0] sm:$0xff]
    %v144 = vld [vmem:[%s48 + $0x2f8] sm:$0xff]
    %v145 = vld [vmem:[%s48 + $0x300] sm:$0xff]
    %v146 = vld [vmem:[%s48 + $0x308] sm:$0xff]
    %v147 = vld [vmem:[%s48 + $0x310] sm:$0xff]
    %v148 = vld [vmem:[%s48 + $0x318] sm:$0xff]
    %v149 = vld [vmem:[%s48 + $0x320] sm:$0xff]
    %v150 = vld [vmem:[%s48 + $0x328] sm:$0xff]
    %v151 = vld [vmem:[%s48 + $0x330] sm:$0xff]
    %v152 = vld [vmem:[%s48 + $0x338] sm:$0xff]
    %v153 = vld [vmem:[%s48 + $0x340] sm:$0xff]
    %v154 = vld [vmem:[%s48 + $0x348] sm:$0xff]
    %v155 = vld [vmem:[%s48 + $0x350] sm:$0xff]
    %v156 = vld [vmem:[%s48 + $0x358] sm:$0xff]
    %v157 = vld [vmem:[%s48 + $0x360] sm:$0xff]
    %v158 = vld [vmem:[%s48 + $0x368] sm:$0xff]
    %v159 = vld [vmem:[%s48 + $0x370] sm:$0xff]
    %v160 = vld [vmem:[%s48 + $0x378] sm:$0xff]
    %v161 = vld [vmem:[%s48 + $0x380] sm:$0xff]
    %v162 = vld [vmem:[%s48 + $0x388] sm:$0xff]
    %v163 = vld [vmem:[%s48 + $0x390] sm:$0xff]
    %v164 = vld [vmem:[%s48 + $0x398] sm:$0xff]
    %v165 = vld [vmem:[%s48 + $0x3a0] sm:$0xff]
    %v166 = vld [vmem:[%s48 + $0x3a8] sm:$0xff]
    %v167 = vld [vmem:[%s48 + $0x3b0] sm:$0xff]
    %v168 = vld [vmem:[%s48 + $0x3b8] sm:$0xff]
    %v169 = vld [vmem:[%s48 + $0x3c0] sm:$0xff]
    %v170 = vld [vmem:[%s48 + $0x3c8] sm:$0xff]
    %v171 = vld [vmem:[%s48 + $0x3d0] sm:$0xff]
    %v172 = vld [vmem:[%s48 + $0x3d8] sm:$0xff]
    %v173 = vld [vmem:[%s48 + $0x3e0] sm:$0xff]
    %v174 = vld [vmem:[%s48 + $0x3e8] sm:$0xff]
    %v175 = vld [vmem:[%s48 + $0x3f0] sm:$0xff]
    %v176 = vld [vmem:[%s48 + $0x3f8] sm:$0xff]
    %v177 = vld [vmem:[%s48 + $0x400] sm:$0xff]
    %v178 = vld [vmem:[%s48 + $0x408] sm:$0xff]
    %v179 = vld [vmem:[%s48 + $0x410] sm:$0xff]
    %v180 = vld [vmem:[%s48 + $0x418] sm:$0xff]
    %v181 = vld [vmem:[%s48 + $0x420] sm:$0xff]
    %v182 = vld [vmem:[%s48 + $0x428] sm:$0xff]
    %v183 = vld [vmem:[%s48 + $0x430] sm:$0xff]
    %v184 = vld [vmem:[%s48 + $0x438] sm:$0xff]
    %v185 = vld [vmem:[%s48 + $0x440] sm:$0xff]
    %v186 = vld [vmem:[%s48 + $0x448] sm:$0xff]
    %v187 = vld [vmem:[%s48 + $0x450] sm:$0xff]
    %v188 = vld [vmem:[%s48 + $0x458] sm:$0xff]
    %v189 = vld [vmem:[%s48 + $0x460] sm:$0xff]
    %v190 = vld [vmem:[%s48 + $0x468] sm:$0xff]
    %v191 = vld [vmem:[%s48 + $0x470] sm:$0xff]
    %v192 = vld [vmem:[%s48 + $0x478] sm:$0xff]
    %v193 = vld [vmem:[%s48 + $0x480] sm:$0xff]
    %v194 = vld [vmem:[%s48 + $0x488] sm:$0xff]
    %v195 = vld [vmem:[%s48 + $0x490] sm:$0xff]
    %v196 = vld [vmem:[%s48 + $0x498] sm:$0xff]
    %v197 = vld [vmem:[%s48 + $0x4a0] sm:$0xff]
    %v198 = vld [vmem:[%s48 + $0x4a8] sm:$0xff]
    %v199 = vld [vmem:[%s48 + $0x4b0] sm:$0xff]
    %v200 = vld [vmem:[%s48 + $0x4b8] sm:$0xff]
    %v201 = vld [vmem:[%s48 + $0x4c0] sm:$0xff]
    %v202 = vld [vmem:[%s48 + $0x4c8] sm:$0xff]
    %v203 = vld [vmem:[%s48 + $0x4d0] sm:$0xff]
    %v204 = vld [vmem:[%s48 + $0x4d8] sm:$0xff]
    %v205 = vld [vmem:[%s48 + $0x4e0] sm:$0xff]
    %v206 = vld [vmem:[%s48 + $0x4e8] sm:$0xff]
    %v207 = vld [vmem:[%s48 + $0x4f0] sm:$0xff]
    %v208 = vld [vmem:[%s48 + $0x4f8] sm:$0xff]
    %v209 = vld [vmem:[%s48 + $0x500] sm:$0xff]
    %v210 = vld [vmem:[%s48 + $0x508] sm:$0xff]
    %v211 = vld [vmem:[%s48 + $0x510] sm:$0xff]
    %v212 = vld [vmem:[%s48 + $0x518] sm:$0xff]
    %v213 = vld [vmem:[%s48 + $0x520] sm:$0xff]
    %v214 = vld [vmem:[%s48 + $0x528] sm:$0xff]
    %v215 = vld [vmem:[%s48 + $0x530] sm:$0xff]
    %v216 = vld [vmem:[%s48 + $0x538] sm:$0xff]
    %v217 = vld [vmem:[%s48 + $0x540] sm:$0xff]
    %v218 = vld [vmem:[%s48 + $0x548] sm:$0xff]
    %v219 = vld [vmem:[%s48 + $0x550] sm:$0xff]
    %v220 = vld [vmem:[%s48 + $0x558] sm:$0xff]
    %v221 = vld [vmem:[%s48 + $0x560] sm:$0xff]
    %v222 = vld [vmem:[%s48 + $0x568] sm:$0xff]
    %v223 = vld [vmem:[%s48 + $0x570] sm:$0xff]
    %v224 = vld [vmem:[%s48 + $0x578] sm:$0xff]
    %v225 = vld [vmem:[%s48 + $0x580] sm:$0xff]
    %v226 = vld [vmem:[%s48 + $0x588] sm:$0xff]
    %v227 = vld [vmem:[%s48 + $0x590] sm:$0xff]
    %v228 = vld [vmem:[%s48 + $0x598] sm:$0xff]
    %v229 = vld [vmem:[%s48 + $0x5a0] sm:$0xff]
    %v230 = vld [vmem:[%s48 + $0x5a8] sm:$0xff]
    %v231 = vld [vmem:[%s48 + $0x5b0] sm:$0xff]
    %v232 = vld [vmem:[%s48 + $0x5b8] sm:$0xff]
    %v233 = vld [vmem:[%s48 + $0x5c0] sm:$0xff]
    %v234 = vld [vmem:[%s48 + $0x5c8] sm:$0xff]
    %v235 = vld [vmem:[%s48 + $0x5d0] sm:$0xff]
    %v236 = vld [vmem:[%s48 + $0x5d8] sm:$0xff]
    %v237 = vld [vmem:[%s48 + $0x5e0] sm:$0xff]
    %v238 = vld [vmem:[%s48 + $0x5e8] sm:$0xff]
    %v239 = vld [vmem:[%s48 + $0x5f0] sm:$0xff]
    %v240 = vld [vmem:[%s48 + $0x5f8] sm:$0xff]
    %v241 = vld [vmem:[%s48 + $0x600] sm:$0xff]
    %v242 = vld [vmem:[%s48 + $0x608] sm:$0xff]
    %v243 = vld [vmem:[%s48 + $0x610] sm:$0xff]
    %v244 = vld [vmem:[%s48 + $0x618] sm:$0xff]
    %v245 = vld [vmem:[%s48 + $0x620] sm:$0xff]
    %v246 = vld [vmem:[%s48 + $0x628] sm:$0xff]
    %v247 = vld [vmem:[%s48 + $0x630] sm:$0xff]
    %v248 = vld [vmem:[%s48 + $0x638] sm:$0xff]
    %v249 = vld [vmem:[%s48 + $0x640] sm:$0xff]
    %v250 = vld [vmem:[%s48 + $0x648] sm:$0xff]
    %v251 = vld [vmem:[%s48 + $0x650] sm:$0xff]
    %v252 = vld [vmem:[%s48 + $0x658] sm:$0xff]
    %v253 = vld [vmem:[%s48 + $0x660] sm:$0xff]
    %v254 = vld [vmem:[%s48 + $0x668] sm:$0xff]
    %v255 = vld [vmem:[%s48 + $0x670] sm:$0xff]
    %v256 = vld [vmem:[%s48 + $0x678] sm:$0xff]
    %v257 = vld [vmem:[%s48 + $0x680] sm:$0xff]
    %v258 = vld [vmem:[%s48 + $0x688] sm:$0xff]
    %v259 = vld [vmem:[%s48 + $0x690] sm:$0xff]
    %v260 = vld [vmem:[%s48 + $0x698] sm:$0xff]
    %v261 = vld [vmem:[%s48 + $0x6a0] sm:$0xff]
    %v262 = vld [vmem:[%s48 + $0x6a8] sm:$0xff]
    %v263 = vld [vmem:[%s48 + $0x6b0] sm:$0xff]
    %v264 = vld [vmem:[%s48 + $0x6b8] sm:$0xff]
    %v265 = vld [vmem:[%s48 + $0x6c0] sm:$0xff]
    %v266 = vld [vmem:[%s48 + $0x6c8] sm:$0xff]
    %v267 = vld [vmem:[%s48 + $0x6d0] sm:$0xff]
    %v268 = vld [vmem:[%s48 + $0x6d8] sm:$0xff]
    %v269 = vld [vmem:[%s48 + $0x6e0] sm:$0xff]
    %v270 = vld [vmem:[%s48 + $0x6e8] sm:$0xff]
    %v271 = vld [vmem:[%s48 + $0x6f0] sm:$0xff]
    %v272 = vld [vmem:[%s48 + $0x6f8] sm:$0xff]
    %v273 = vld [vmem:[%s48 + $0x700] sm:$0xff]
    %v274 = vld [vmem:[%s48 + $0x708] sm:$0xff]
    %v275 = vld [vmem:[%s48 + $0x710] sm:$0xff]
    %v276 = vld [vmem:[%s48 + $0x718] sm:$0xff]
    %v277 = vld [vmem:[%s48 + $0x720] sm:$0xff]
    %v278 = vld [vmem:[%s48 + $0x728] sm:$0xff]
    %v279 = vld [vmem:[%s48 + $0x730] sm:$0xff]
    %v280 = vld [vmem:[%s48 + $0x738] sm:$0xff]
    %v281 = vld [vmem:[%s48 + $0x740] sm:$0xff]
    %v282 = vld [vmem:[%s48 + $0x748] sm:$0xff]
    %v283 = vld [vmem:[%s48 + $0x750] sm:$0xff]
    %v284 = vld [vmem:[%s48 + $0x758] sm:$0xff]
    %v285 = vld [vmem:[%s48 + $0x760] sm:$0xff]
    %v286 = vld [vmem:[%s48 + $0x768] sm:$0xff]
    %v287 = vld [vmem:[%s48 + $0x770] sm:$0xff]
    %v288 = vld [vmem:[%s48 + $0x778] sm:$0xff]
    %v289 = vld [vmem:[%s48 + $0x780] sm:$0xff]
    %v290 = vld [vmem:[%s48 + $0x788] sm:$0xff]
    %v291 = vld [vmem:[%s48 + $0x790] sm:$0xff]
    %v292 = vld [vmem:[%s48 + $0x798] sm:$0xff]
    %v293 = vld [vmem:[%s48 + $0x7a0] sm:$0xff]
    %v294 = vld [vmem:[%s48 + $0x7a8] sm:$0xff]
    %v295 = vld [vmem:[%s48 + $0x7b0] sm:$0xff]
    %v296 = vld [vmem:[%s48 + $0x7b8] sm:$0xff]
    %v297 = vld [vmem:[%s48 + $0x7c0] sm:$0xff]
    %v298 = vld [vmem:[%s48 + $0x7c8] sm:$0xff]
    %v299 = vld [vmem:[%s48 + $0x7d0] sm:$0xff]
    %v300 = vld [vmem:[%s48 + $0x7d8] sm:$0xff]
    %v301 = vld [vmem:[%s48 + $0x7e0] sm:$0xff]
    %v302 = vld [vmem:[%s48 + $0x7e8] sm:$0xff]
    %v303 = vld [vmem:[%s48 + $0x7f0] sm:$0xff]
    %v304 = vld [vmem:[%s48 + $0x7f8] sm:$0xff]
    %s305 = smul.addr %s46, 8
    %s306 = scalar_lea.vmem [#allocation5], %s305
    %v307 = vld [vmem:[%s306] sm:$0xff]
    %v308 = vld [vmem:[%s306 + $0x8] sm:$0xff]
    %v309 = vld [vmem:[%s306 + $0x10] sm:$0xff]
    %v310 = vld [vmem:[%s306 + $0x18] sm:$0xff]
    %v311 = vld [vmem:[%s306 + $0x20] sm:$0xff]
    %v312 = vld [vmem:[%s306 + $0x28] sm:$0xff]
    %v313 = vld [vmem:[%s306 + $0x30] sm:$0xff]
    %v314 = vld [vmem:[%s306 + $0x38] sm:$0xff]
    %v315 = vld [vmem:[%s306 + $0x40] sm:$0xff]
    %v316 = vld [vmem:[%s306 + $0x48] sm:$0xff]
    %v317 = vld [vmem:[%s306 + $0x50] sm:$0xff]
    %v318 = vld [vmem:[%s306 + $0x58] sm:$0xff]
    %v319 = vld [vmem:[%s306 + $0x60] sm:$0xff]
    %v320 = vld [vmem:[%s306 + $0x68] sm:$0xff]
    %v321 = vld [vmem:[%s306 + $0x70] sm:$0xff]
    %v322 = vld [vmem:[%s306 + $0x78] sm:$0xff]
    %v323 = vld [vmem:[%s306 + $0x80] sm:$0xff]
    %v324 = vld [vmem:[%s306 + $0x88] sm:$0xff]
    %v325 = vld [vmem:[%s306 + $0x90] sm:$0xff]
    %v326 = vld [vmem:[%s306 + $0x98] sm:$0xff]
    %v327 = vld [vmem:[%s306 + $0xa0] sm:$0xff]
    %v328 = vld [vmem:[%s306 + $0xa8] sm:$0xff]
    %v329 = vld [vmem:[%s306 + $0xb0] sm:$0xff]
    %v330 = vld [vmem:[%s306 + $0xb8] sm:$0xff]
    %v331 = vld [vmem:[%s306 + $0xc0] sm:$0xff]
    %v332 = vld [vmem:[%s306 + $0xc8] sm:$0xff]
    %v333 = vld [vmem:[%s306 + $0xd0] sm:$0xff]
    %v334 = vld [vmem:[%s306 + $0xd8] sm:$0xff]
    %v335 = vld [vmem:[%s306 + $0xe0] sm:$0xff]
    %v336 = vld [vmem:[%s306 + $0xe8] sm:$0xff]
    %v337 = vld [vmem:[%s306 + $0xf0] sm:$0xff]
    %v338 = vld [vmem:[%s306 + $0xf8] sm:$0xff]
    %v339 = vld [vmem:[%s306 + $0x100] sm:$0xff]
    %v340 = vld [vmem:[%s306 + $0x108] sm:$0xff]
    %v341 = vld [vmem:[%s306 + $0x110] sm:$0xff]
    %v342 = vld [vmem:[%s306 + $0x118] sm:$0xff]
    %v343 = vld [vmem:[%s306 + $0x120] sm:$0xff]
    %v344 = vld [vmem:[%s306 + $0x128] sm:$0xff]
    %v345 = vld [vmem:[%s306 + $0x130] sm:$0xff]
    %v346 = vld [vmem:[%s306 + $0x138] sm:$0xff]
    %v347 = vld [vmem:[%s306 + $0x140] sm:$0xff]
    %v348 = vld [vmem:[%s306 + $0x148] sm:$0xff]
    %v349 = vld [vmem:[%s306 + $0x150] sm:$0xff]
    %v350 = vld [vmem:[%s306 + $0x158] sm:$0xff]
    %v351 = vld [vmem:[%s306 + $0x160] sm:$0xff]
    %v352 = vld [vmem:[%s306 + $0x168] sm:$0xff]
    %v353 = vld [vmem:[%s306 + $0x170] sm:$0xff]
    %v354 = vld [vmem:[%s306 + $0x178] sm:$0xff]
    %v355 = vld [vmem:[%s306 + $0x180] sm:$0xff]
    %v356 = vld [vmem:[%s306 + $0x188] sm:$0xff]
    %v357 = vld [vmem:[%s306 + $0x190] sm:$0xff]
    %v358 = vld [vmem:[%s306 + $0x198] sm:$0xff]
    %v359 = vld [vmem:[%s306 + $0x1a0] sm:$0xff]
    %v360 = vld [vmem:[%s306 + $0x1a8] sm:$0xff]
    %v361 = vld [vmem:[%s306 + $0x1b0] sm:$0xff]
    %v362 = vld [vmem:[%s306 + $0x1b8] sm:$0xff]
    %v363 = vld [vmem:[%s306 + $0x1c0] sm:$0xff]
    %v364 = vld [vmem:[%s306 + $0x1c8] sm:$0xff]
    %v365 = vld [vmem:[%s306 + $0x1d0] sm:$0xff]
    %v366 = vld [vmem:[%s306 + $0x1d8] sm:$0xff]
    %v367 = vld [vmem:[%s306 + $0x1e0] sm:$0xff]
    %v368 = vld [vmem:[%s306 + $0x1e8] sm:$0xff]
    %v369 = vld [vmem:[%s306 + $0x1f0] sm:$0xff]
    %v370 = vld [vmem:[%s306 + $0x1f8] sm:$0xff]
    %v371 = vld [vmem:[%s306 + $0x200] sm:$0xff]
    %v372 = vld [vmem:[%s306 + $0x208] sm:$0xff]
    %v373 = vld [vmem:[%s306 + $0x210] sm:$0xff]
    %v374 = vld [vmem:[%s306 + $0x218] sm:$0xff]
    %v375 = vld [vmem:[%s306 + $0x220] sm:$0xff]
    %v376 = vld [vmem:[%s306 + $0x228] sm:$0xff]
    %v377 = vld [vmem:[%s306 + $0x230] sm:$0xff]
    %v378 = vld [vmem:[%s306 + $0x238] sm:$0xff]
    %v379 = vld [vmem:[%s306 + $0x240] sm:$0xff]
    %v380 = vld [vmem:[%s306 + $0x248] sm:$0xff]
    %v381 = vld [vmem:[%s306 + $0x250] sm:$0xff]
    %v382 = vld [vmem:[%s306 + $0x258] sm:$0xff]
    %v383 = vld [vmem:[%s306 + $0x260] sm:$0xff]
    %v384 = vld [vmem:[%s306 + $0x268] sm:$0xff]
    %v385 = vld [vmem:[%s306 + $0x270] sm:$0xff]
    %v386 = vld [vmem:[%s306 + $0x278] sm:$0xff]
    %v387 = vld [vmem:[%s306 + $0x280] sm:$0xff]
    %v388 = vld [vmem:[%s306 + $0x288] sm:$0xff]
    %v389 = vld [vmem:[%s306 + $0x290] sm:$0xff]
    %v390 = vld [vmem:[%s306 + $0x298] sm:$0xff]
    %v391 = vld [vmem:[%s306 + $0x2a0] sm:$0xff]
    %v392 = vld [vmem:[%s306 + $0x2a8] sm:$0xff]
    %v393 = vld [vmem:[%s306 + $0x2b0] sm:$0xff]
    %v394 = vld [vmem:[%s306 + $0x2b8] sm:$0xff]
    %v395 = vld [vmem:[%s306 + $0x2c0] sm:$0xff]
    %v396 = vld [vmem:[%s306 + $0x2c8] sm:$0xff]
    %v397 = vld [vmem:[%s306 + $0x2d0] sm:$0xff]
    %v398 = vld [vmem:[%s306 + $0x2d8] sm:$0xff]
    %v399 = vld [vmem:[%s306 + $0x2e0] sm:$0xff]
    %v400 = vld [vmem:[%s306 + $0x2e8] sm:$0xff]
    %v401 = vld [vmem:[%s306 + $0x2f0] sm:$0xff]
    %v402 = vld [vmem:[%s306 + $0x2f8] sm:$0xff]
    %v403 = vld [vmem:[%s306 + $0x300] sm:$0xff]
    %v404 = vld [vmem:[%s306 + $0x308] sm:$0xff]
    %v405 = vld [vmem:[%s306 + $0x310] sm:$0xff]
    %v406 = vld [vmem:[%s306 + $0x318] sm:$0xff]
    %v407 = vld [vmem:[%s306 + $0x320] sm:$0xff]
    %v408 = vld [vmem:[%s306 + $0x328] sm:$0xff]
    %v409 = vld [vmem:[%s306 + $0x330] sm:$0xff]
    %v410 = vld [vmem:[%s306 + $0x338] sm:$0xff]
    %v411 = vld [vmem:[%s306 + $0x340] sm:$0xff]
    %v412 = vld [vmem:[%s306 + $0x348] sm:$0xff]
    %v413 = vld [vmem:[%s306 + $0x350] sm:$0xff]
    %v414 = vld [vmem:[%s306 + $0x358] sm:$0xff]
    %v415 = vld [vmem:[%s306 + $0x360] sm:$0xff]
    %v416 = vld [vmem:[%s306 + $0x368] sm:$0xff]
    %v417 = vld [vmem:[%s306 + $0x370] sm:$0xff]
    %v418 = vld [vmem:[%s306 + $0x378] sm:$0xff]
    %v419 = vld [vmem:[%s306 + $0x380] sm:$0xff]
    %v420 = vld [vmem:[%s306 + $0x388] sm:$0xff]
    %v421 = vld [vmem:[%s306 + $0x390] sm:$0xff]
    %v422 = vld [vmem:[%s306 + $0x398] sm:$0xff]
    %v423 = vld [vmem:[%s306 + $0x3a0] sm:$0xff]
    %v424 = vld [vmem:[%s306 + $0x3a8] sm:$0xff]
    %v425 = vld [vmem:[%s306 + $0x3b0] sm:$0xff]
    %v426 = vld [vmem:[%s306 + $0x3b8] sm:$0xff]
    %v427 = vld [vmem:[%s306 + $0x3c0] sm:$0xff]
    %v428 = vld [vmem:[%s306 + $0x3c8] sm:$0xff]
    %v429 = vld [vmem:[%s306 + $0x3d0] sm:$0xff]
    %v430 = vld [vmem:[%s306 + $0x3d8] sm:$0xff]
    %v431 = vld [vmem:[%s306 + $0x3e0] sm:$0xff]
    %v432 = vld [vmem:[%s306 + $0x3e8] sm:$0xff]
    %v433 = vld [vmem:[%s306 + $0x3f0] sm:$0xff]
    %v434 = vld [vmem:[%s306 + $0x3f8] sm:$0xff]
    %v435 = vld [vmem:[%s306 + $0x400] sm:$0xff]
    %v436 = vld [vmem:[%s306 + $0x408] sm:$0xff]
    %v437 = vld [vmem:[%s306 + $0x410] sm:$0xff]
    %v438 = vld [vmem:[%s306 + $0x418] sm:$0xff]
    %v439 = vld [vmem:[%s306 + $0x420] sm:$0xff]
    %v440 = vld [vmem:[%s306 + $0x428] sm:$0xff]
    %v441 = vld [vmem:[%s306 + $0x430] sm:$0xff]
    %v442 = vld [vmem:[%s306 + $0x438] sm:$0xff]
    %v443 = vld [vmem:[%s306 + $0x440] sm:$0xff]
    %v444 = vld [vmem:[%s306 + $0x448] sm:$0xff]
    %v445 = vld [vmem:[%s306 + $0x450] sm:$0xff]
    %v446 = vld [vmem:[%s306 + $0x458] sm:$0xff]
    %v447 = vld [vmem:[%s306 + $0x460] sm:$0xff]
    %v448 = vld [vmem:[%s306 + $0x468] sm:$0xff]
    %v449 = vld [vmem:[%s306 + $0x470] sm:$0xff]
    %v450 = vld [vmem:[%s306 + $0x478] sm:$0xff]
    %v451 = vld [vmem:[%s306 + $0x480] sm:$0xff]
    %v452 = vld [vmem:[%s306 + $0x488] sm:$0xff]
    %v453 = vld [vmem:[%s306 + $0x490] sm:$0xff]
    %v454 = vld [vmem:[%s306 + $0x498] sm:$0xff]
    %v455 = vld [vmem:[%s306 + $0x4a0] sm:$0xff]
    %v456 = vld [vmem:[%s306 + $0x4a8] sm:$0xff]
    %v457 = vld [vmem:[%s306 + $0x4b0] sm:$0xff]
    %v458 = vld [vmem:[%s306 + $0x4b8] sm:$0xff]
    %v459 = vld [vmem:[%s306 + $0x4c0] sm:$0xff]
    %v460 = vld [vmem:[%s306 + $0x4c8] sm:$0xff]
    %v461 = vld [vmem:[%s306 + $0x4d0] sm:$0xff]
    %v462 = vld [vmem:[%s306 + $0x4d8] sm:$0xff]
    %v463 = vld [vmem:[%s306 + $0x4e0] sm:$0xff]
    %v464 = vld [vmem:[%s306 + $0x4e8] sm:$0xff]
    %v465 = vld [vmem:[%s306 + $0x4f0] sm:$0xff]
    %v466 = vld [vmem:[%s306 + $0x4f8] sm:$0xff]
    %v467 = vld [vmem:[%s306 + $0x500] sm:$0xff]
    %v468 = vld [vmem:[%s306 + $0x508] sm:$0xff]
    %v469 = vld [vmem:[%s306 + $0x510] sm:$0xff]
    %v470 = vld [vmem:[%s306 + $0x518] sm:$0xff]
    %v471 = vld [vmem:[%s306 + $0x520] sm:$0xff]
    %v472 = vld [vmem:[%s306 + $0x528] sm:$0xff]
    %v473 = vld [vmem:[%s306 + $0x530] sm:$0xff]
    %v474 = vld [vmem:[%s306 + $0x538] sm:$0xff]
    %v475 = vld [vmem:[%s306 + $0x540] sm:$0xff]
    %v476 = vld [vmem:[%s306 + $0x548] sm:$0xff]
    %v477 = vld [vmem:[%s306 + $0x550] sm:$0xff]
    %v478 = vld [vmem:[%s306 + $0x558] sm:$0xff]
    %v479 = vld [vmem:[%s306 + $0x560] sm:$0xff]
    %v480 = vld [vmem:[%s306 + $0x568] sm:$0xff]
    %v481 = vld [vmem:[%s306 + $0x570] sm:$0xff]
    %v482 = vld [vmem:[%s306 + $0x578] sm:$0xff]
    %v483 = vld [vmem:[%s306 + $0x580] sm:$0xff]
    %v484 = vld [vmem:[%s306 + $0x588] sm:$0xff]
    %v485 = vld [vmem:[%s306 + $0x590] sm:$0xff]
    %v486 = vld [vmem:[%s306 + $0x598] sm:$0xff]
    %v487 = vld [vmem:[%s306 + $0x5a0] sm:$0xff]
    %v488 = vld [vmem:[%s306 + $0x5a8] sm:$0xff]
    %v489 = vld [vmem:[%s306 + $0x5b0] sm:$0xff]
    %v490 = vld [vmem:[%s306 + $0x5b8] sm:$0xff]
    %v491 = vld [vmem:[%s306 + $0x5c0] sm:$0xff]
    %v492 = vld [vmem:[%s306 + $0x5c8] sm:$0xff]
    %v493 = vld [vmem:[%s306 + $0x5d0] sm:$0xff]
    %v494 = vld [vmem:[%s306 + $0x5d8] sm:$0xff]
    %v495 = vld [vmem:[%s306 + $0x5e0] sm:$0xff]
    %v496 = vld [vmem:[%s306 + $0x5e8] sm:$0xff]
    %v497 = vld [vmem:[%s306 + $0x5f0] sm:$0xff]
    %v498 = vld [vmem:[%s306 + $0x5f8] sm:$0xff]
    %v499 = vld [vmem:[%s306 + $0x600] sm:$0xff]
    %v500 = vld [vmem:[%s306 + $0x608] sm:$0xff]
    %v501 = vld [vmem:[%s306 + $0x610] sm:$0xff]
    %v502 = vld [vmem:[%s306 + $0x618] sm:$0xff]
    %v503 = vld [vmem:[%s306 + $0x620] sm:$0xff]
    %v504 = vld [vmem:[%s306 + $0x628] sm:$0xff]
    %v505 = vld [vmem:[%s306 + $0x630] sm:$0xff]
    %v506 = vld [vmem:[%s306 + $0x638] sm:$0xff]
    %v507 = vld [vmem:[%s306 + $0x640] sm:$0xff]
    %v508 = vld [vmem:[%s306 + $0x648] sm:$0xff]
    %v509 = vld [vmem:[%s306 + $0x650] sm:$0xff]
    %v510 = vld [vmem:[%s306 + $0x658] sm:$0xff]
    %v511 = vld [vmem:[%s306 + $0x660] sm:$0xff]
    %v512 = vld [vmem:[%s306 + $0x668] sm:$0xff]
    %v513 = vld [vmem:[%s306 + $0x670] sm:$0xff]
    %v514 = vld [vmem:[%s306 + $0x678] sm:$0xff]
    %v515 = vld [vmem:[%s306 + $0x680] sm:$0xff]
    %v516 = vld [vmem:[%s306 + $0x688] sm:$0xff]
    %v517 = vld [vmem:[%s306 + $0x690] sm:$0xff]
    %v518 = vld [vmem:[%s306 + $0x698] sm:$0xff]
    %v519 = vld [vmem:[%s306 + $0x6a0] sm:$0xff]
    %v520 = vld [vmem:[%s306 + $0x6a8] sm:$0xff]
    %v521 = vld [vmem:[%s306 + $0x6b0] sm:$0xff]
    %v522 = vld [vmem:[%s306 + $0x6b8] sm:$0xff]
    %v523 = vld [vmem:[%s306 + $0x6c0] sm:$0xff]
    %v524 = vld [vmem:[%s306 + $0x6c8] sm:$0xff]
    %v525 = vld [vmem:[%s306 + $0x6d0] sm:$0xff]
    %v526 = vld [vmem:[%s306 + $0x6d8] sm:$0xff]
    %v527 = vld [vmem:[%s306 + $0x6e0] sm:$0xff]
    %v528 = vld [vmem:[%s306 + $0x6e8] sm:$0xff]
    %v529 = vld [vmem:[%s306 + $0x6f0] sm:$0xff]
    %v530 = vld [vmem:[%s306 + $0x6f8] sm:$0xff]
    %v531 = vld [vmem:[%s306 + $0x700] sm:$0xff]
    %v532 = vld [vmem:[%s306 + $0x708] sm:$0xff]
    %v533 = vld [vmem:[%s306 + $0x710] sm:$0xff]
    %v534 = vld [vmem:[%s306 + $0x718] sm:$0xff]
    %v535 = vld [vmem:[%s306 + $0x720] sm:$0xff]
    %v536 = vld [vmem:[%s306 + $0x728] sm:$0xff]
    %v537 = vld [vmem:[%s306 + $0x730] sm:$0xff]
    %v538 = vld [vmem:[%s306 + $0x738] sm:$0xff]
    %v539 = vld [vmem:[%s306 + $0x740] sm:$0xff]
    %v540 = vld [vmem:[%s306 + $0x748] sm:$0xff]
    %v541 = vld [vmem:[%s306 + $0x750] sm:$0xff]
    %v542 = vld [vmem:[%s306 + $0x758] sm:$0xff]
    %v543 = vld [vmem:[%s306 + $0x760] sm:$0xff]
    %v544 = vld [vmem:[%s306 + $0x768] sm:$0xff]
    %v545 = vld [vmem:[%s306 + $0x770] sm:$0xff]
    %v546 = vld [vmem:[%s306 + $0x778] sm:$0xff]
    %v547 = vld [vmem:[%s306 + $0x780] sm:$0xff]
    %v548 = vld [vmem:[%s306 + $0x788] sm:$0xff]
    %v549 = vld [vmem:[%s306 + $0x790] sm:$0xff]
    %v550 = vld [vmem:[%s306 + $0x798] sm:$0xff]
    %v551 = vld [vmem:[%s306 + $0x7a0] sm:$0xff]
    %v552 = vld [vmem:[%s306 + $0x7a8] sm:$0xff]
    %v553 = vld [vmem:[%s306 + $0x7b0] sm:$0xff]
    %v554 = vld [vmem:[%s306 + $0x7b8] sm:$0xff]
    %v555 = vld [vmem:[%s306 + $0x7c0] sm:$0xff]
    %v556 = vld [vmem:[%s306 + $0x7c8] sm:$0xff]
    %v557 = vld [vmem:[%s306 + $0x7d0] sm:$0xff]
    %v558 = vld [vmem:[%s306 + $0x7d8] sm:$0xff]
    %v559 = vld [vmem:[%s306 + $0x7e0] sm:$0xff]
    %v560 = vld [vmem:[%s306 + $0x7e8] sm:$0xff]
    %v561 = vld [vmem:[%s306 + $0x7f0] sm:$0xff]
    %v562 = vld [vmem:[%s306 + $0x7f8] sm:$0xff]
    %v563 = vsub.f32 %v49, %v307
    %v564 = vsub.f32 %v50, %v308
    %v565 = vsub.f32 %v51, %v309
    %v566 = vsub.f32 %v52, %v310
    %v567 = vsub.f32 %v53, %v311
    %v568 = vsub.f32 %v54, %v312
    %v569 = vsub.f32 %v55, %v313
    %v570 = vsub.f32 %v56, %v314
    %v571 = vsub.f32 %v57, %v315
    %v572 = vsub.f32 %v58, %v316
    %v573 = vsub.f32 %v59, %v317
    %v574 = vsub.f32 %v60, %v318
    %v575 = vsub.f32 %v61, %v319
    %v576 = vsub.f32 %v62, %v320
    %v577 = vsub.f32 %v63, %v321
    %v578 = vsub.f32 %v64, %v322
    %v579 = vsub.f32 %v65, %v323
    %v580 = vsub.f32 %v66, %v324
    %v581 = vsub.f32 %v67, %v325
    %v582 = vsub.f32 %v68, %v326
    %v583 = vsub.f32 %v69, %v327
    %v584 = vsub.f32 %v70, %v328
    %v585 = vsub.f32 %v71, %v329
    %v586 = vsub.f32 %v72, %v330
    %v587 = vsub.f32 %v73, %v331
    %v588 = vsub.f32 %v74, %v332
    %v589 = vsub.f32 %v75, %v333
    %v590 = vsub.f32 %v76, %v334
    %v591 = vsub.f32 %v77, %v335
    %v592 = vsub.f32 %v78, %v336
    %v593 = vsub.f32 %v79, %v337
    %v594 = vsub.f32 %v80, %v338
    %v595 = vsub.f32 %v81, %v339
    %v596 = vsub.f32 %v82, %v340
    %v597 = vsub.f32 %v83, %v341
    %v598 = vsub.f32 %v84, %v342
    %v599 = vsub.f32 %v85, %v343
    %v600 = vsub.f32 %v86, %v344
    %v601 = vsub.f32 %v87, %v345
    %v602 = vsub.f32 %v88, %v346
    %v603 = vsub.f32 %v89, %v347
    %v604 = vsub.f32 %v90, %v348
    %v605 = vsub.f32 %v91, %v349
    %v606 = vsub.f32 %v92, %v350
    %v607 = vsub.f32 %v93, %v351
    %v608 = vsub.f32 %v94, %v352
    %v609 = vsub.f32 %v95, %v353
    %v610 = vsub.f32 %v96, %v354
    %v611 = vsub.f32 %v97, %v355
    %v612 = vsub.f32 %v98, %v356
    %v613 = vsub.f32 %v99, %v357
    %v614 = vsub.f32 %v100, %v358
    %v615 = vsub.f32 %v101, %v359
    %v616 = vsub.f32 %v102, %v360
    %v617 = vsub.f32 %v103, %v361
    %v618 = vsub.f32 %v104, %v362
    %v619 = vsub.f32 %v105, %v363
    %v620 = vsub.f32 %v106, %v364
    %v621 = vsub.f32 %v107, %v365
    %v622 = vsub.f32 %v108, %v366
    %v623 = vsub.f32 %v109, %v367
    %v624 = vsub.f32 %v110, %v368
    %v625 = vsub.f32 %v111, %v369
    %v626 = vsub.f32 %v112, %v370
    %v627 = vsub.f32 %v113, %v371
    %v628 = vsub.f32 %v114, %v372
    %v629 = vsub.f32 %v115, %v373
    %v630 = vsub.f32 %v116, %v374
    %v631 = vsub.f32 %v117, %v375
    %v632 = vsub.f32 %v118, %v376
    %v633 = vsub.f32 %v119, %v377
    %v634 = vsub.f32 %v120, %v378
    %v635 = vsub.f32 %v121, %v379
    %v636 = vsub.f32 %v122, %v380
    %v637 = vsub.f32 %v123, %v381
    %v638 = vsub.f32 %v124, %v382
    %v639 = vsub.f32 %v125, %v383
    %v640 = vsub.f32 %v126, %v384
    %v641 = vsub.f32 %v127, %v385
    %v642 = vsub.f32 %v128, %v386
    %v643 = vsub.f32 %v129, %v387
    %v644 = vsub.f32 %v130, %v388
    %v645 = vsub.f32 %v131, %v389
    %v646 = vsub.f32 %v132, %v390
    %v647 = vsub.f32 %v133, %v391
    %v648 = vsub.f32 %v134, %v392
    %v649 = vsub.f32 %v135, %v393
    %v650 = vsub.f32 %v136, %v394
    %v651 = vsub.f32 %v137, %v395
    %v652 = vsub.f32 %v138, %v396
    %v653 = vsub.f32 %v139, %v397
    %v654 = vsub.f32 %v140, %v398
    %v655 = vsub.f32 %v141, %v399
    %v656 = vsub.f32 %v142, %v400
    %v657 = vsub.f32 %v143, %v401
    %v658 = vsub.f32 %v144, %v402
    %v659 = vsub.f32 %v145, %v403
    %v660 = vsub.f32 %v146, %v404
    %v661 = vsub.f32 %v147, %v405
    %v662 = vsub.f32 %v148, %v406
    %v663 = vsub.f32 %v149, %v407
    %v664 = vsub.f32 %v150, %v408
    %v665 = vsub.f32 %v151, %v409
    %v666 = vsub.f32 %v152, %v410
    %v667 = vsub.f32 %v153, %v411
    %v668 = vsub.f32 %v154, %v412
    %v669 = vsub.f32 %v155, %v413
    %v670 = vsub.f32 %v156, %v414
    %v671 = vsub.f32 %v157, %v415
    %v672 = vsub.f32 %v158, %v416
    %v673 = vsub.f32 %v159, %v417
    %v674 = vsub.f32 %v160, %v418
    %v675 = vsub.f32 %v161, %v419
    %v676 = vsub.f32 %v162, %v420
    %v677 = vsub.f32 %v163, %v421
    %v678 = vsub.f32 %v164, %v422
    %v679 = vsub.f32 %v165, %v423
    %v680 = vsub.f32 %v166, %v424
    %v681 = vsub.f32 %v167, %v425
    %v682 = vsub.f32 %v168, %v426
    %v683 = vsub.f32 %v169, %v427
    %v684 = vsub.f32 %v170, %v428
    %v685 = vsub.f32 %v171, %v429
    %v686 = vsub.f32 %v172, %v430
    %v687 = vsub.f32 %v173, %v431
    %v688 = vsub.f32 %v174, %v432
    %v689 = vsub.f32 %v175, %v433
    %v690 = vsub.f32 %v176, %v434
    %v691 = vsub.f32 %v177, %v435
    %v692 = vsub.f32 %v178, %v436
    %v693 = vsub.f32 %v179, %v437
    %v694 = vsub.f32 %v180, %v438
    %v695 = vsub.f32 %v181, %v439
    %v696 = vsub.f32 %v182, %v440
    %v697 = vsub.f32 %v183, %v441
    %v698 = vsub.f32 %v184, %v442
    %v699 = vsub.f32 %v185, %v443
    %v700 = vsub.f32 %v186, %v444
    %v701 = vsub.f32 %v187, %v445
    %v702 = vsub.f32 %v188, %v446
    %v703 = vsub.f32 %v189, %v447
    %v704 = vsub.f32 %v190, %v448
    %v705 = vsub.f32 %v191, %v449
    %v706 = vsub.f32 %v192, %v450
    %v707 = vsub.f32 %v193, %v451
    %v708 = vsub.f32 %v194, %v452
    %v709 = vsub.f32 %v195, %v453
    %v710 = vsub.f32 %v196, %v454
    %v711 = vsub.f32 %v197, %v455
    %v712 = vsub.f32 %v198, %v456
    %v713 = vsub.f32 %v199, %v457
    %v714 = vsub.f32 %v200, %v458
    %v715 = vsub.f32 %v201, %v459
    %v716 = vsub.f32 %v202, %v460
    %v717 = vsub.f32 %v203, %v461
    %v718 = vsub.f32 %v204, %v462
    %v719 = vsub.f32 %v205, %v463
    %v720 = vsub.f32 %v206, %v464
    %v721 = vsub.f32 %v207, %v465
    %v722 = vsub.f32 %v208, %v466
    %v723 = vsub.f32 %v209, %v467
    %v724 = vsub.f32 %v210, %v468
    %v725 = vsub.f32 %v211, %v469
    %v726 = vsub.f32 %v212, %v470
    %v727 = vsub.f32 %v213, %v471
    %v728 = vsub.f32 %v214, %v472
    %v729 = vsub.f32 %v215, %v473
    %v730 = vsub.f32 %v216, %v474
    %v731 = vsub.f32 %v217, %v475
    %v732 = vsub.f32 %v218, %v476
    %v733 = vsub.f32 %v219, %v477
    %v734 = vsub.f32 %v220, %v478
    %v735 = vsub.f32 %v221, %v479
    %v736 = vsub.f32 %v222, %v480
    %v737 = vsub.f32 %v223, %v481
    %v738 = vsub.f32 %v224, %v482
    %v739 = vsub.f32 %v225, %v483
    %v740 = vsub.f32 %v226, %v484
    %v741 = vsub.f32 %v227, %v485
    %v742 = vsub.f32 %v228, %v486
    %v743 = vsub.f32 %v229, %v487
    %v744 = vsub.f32 %v230, %v488
    %v745 = vsub.f32 %v231, %v489
    %v746 = vsub.f32 %v232, %v490
    %v747 = vsub.f32 %v233, %v491
    %v748 = vsub.f32 %v234, %v492
    %v749 = vsub.f32 %v235, %v493
    %v750 = vsub.f32 %v236, %v494
    %v751 = vsub.f32 %v237, %v495
    %v752 = vsub.f32 %v238, %v496
    %v753 = vsub.f32 %v239, %v497
    %v754 = vsub.f32 %v240, %v498
    %v755 = vsub.f32 %v241, %v499
    %v756 = vsub.f32 %v242, %v500
    %v757 = vsub.f32 %v243, %v501
    %v758 = vsub.f32 %v244, %v502
    %v759 = vsub.f32 %v245, %v503
    %v760 = vsub.f32 %v246, %v504
    %v761 = vsub.f32 %v247, %v505
    %v762 = vsub.f32 %v248, %v506
    %v763 = vsub.f32 %v249, %v507
    %v764 = vsub.f32 %v250, %v508
    %v765 = vsub.f32 %v251, %v509
    %v766 = vsub.f32 %v252, %v510
    %v767 = vsub.f32 %v253, %v511
    %v768 = vsub.f32 %v254, %v512
    %v769 = vsub.f32 %v255, %v513
    %v770 = vsub.f32 %v256, %v514
    %v771 = vsub.f32 %v257, %v515
    %v772 = vsub.f32 %v258, %v516
    %v773 = vsub.f32 %v259, %v517
    %v774 = vsub.f32 %v260, %v518
    %v775 = vsub.f32 %v261, %v519
    %v776 = vsub.f32 %v262, %v520
    %v777 = vsub.f32 %v263, %v521
    %v778 = vsub.f32 %v264, %v522
    %v779 = vsub.f32 %v265, %v523
    %v780 = vsub.f32 %v266, %v524
    %v781 = vsub.f32 %v267, %v525
    %v782 = vsub.f32 %v268, %v526
    %v783 = vsub.f32 %v269, %v527
    %v784 = vsub.f32 %v270, %v528
    %v785 = vsub.f32 %v271, %v529
    %v786 = vsub.f32 %v272, %v530
    %v787 = vsub.f32 %v273, %v531
    %v788 = vsub.f32 %v274, %v532
    %v789 = vsub.f32 %v275, %v533
    %v790 = vsub.f32 %v276, %v534
    %v791 = vsub.f32 %v277, %v535
    %v792 = vsub.f32 %v278, %v536
    %v793 = vsub.f32 %v279, %v537
    %v794 = vsub.f32 %v280, %v538
    %v795 = vsub.f32 %v281, %v539
    %v796 = vsub.f32 %v282, %v540
    %v797 = vsub.f32 %v283, %v541
    %v798 = vsub.f32 %v284, %v542
    %v799 = vsub.f32 %v285, %v543
    %v800 = vsub.f32 %v286, %v544
    %v801 = vsub.f32 %v287, %v545
    %v802 = vsub.f32 %v288, %v546
    %v803 = vsub.f32 %v289, %v547
    %v804 = vsub.f32 %v290, %v548
    %v805 = vsub.f32 %v291, %v549
    %v806 = vsub.f32 %v292, %v550
    %v807 = vsub.f32 %v293, %v551
    %v808 = vsub.f32 %v294, %v552
    %v809 = vsub.f32 %v295, %v553
    %v810 = vsub.f32 %v296, %v554
    %v811 = vsub.f32 %v297, %v555
    %v812 = vsub.f32 %v298, %v556
    %v813 = vsub.f32 %v299, %v557
    %v814 = vsub.f32 %v300, %v558
    %v815 = vsub.f32 %v301, %v559
    %v816 = vsub.f32 %v302, %v560
    %v817 = vsub.f32 %v303, %v561
    %v818 = vsub.f32 %v304, %v562
    %v819 = vadd.f32 %v563, 1e-06
    %v820 = vadd.f32 %v564, 1e-06
    %v821 = vadd.f32 %v565, 1e-06
    %v822 = vadd.f32 %v566, 1e-06
    %v823 = vadd.f32 %v567, 1e-06
    %v824 = vadd.f32 %v568, 1e-06
    %v825 = vadd.f32 %v569, 1e-06
    %v826 = vadd.f32 %v570, 1e-06
    %v827 = vadd.f32 %v571, 1e-06
    %v828 = vadd.f32 %v572, 1e-06
    %v829 = vadd.f32 %v573, 1e-06
    %v830 = vadd.f32 %v574, 1e-06
    %v831 = vadd.f32 %v575, 1e-06
    %v832 = vadd.f32 %v576, 1e-06
    %v833 = vadd.f32 %v577, 1e-06
    %v834 = vadd.f32 %v578, 1e-06
    %v835 = vadd.f32 %v579, 1e-06
    %v836 = vadd.f32 %v580, 1e-06
    %v837 = vadd.f32 %v581, 1e-06
    %v838 = vadd.f32 %v582, 1e-06
    %v839 = vadd.f32 %v583, 1e-06
    %v840 = vadd.f32 %v584, 1e-06
    %v841 = vadd.f32 %v585, 1e-06
    %v842 = vadd.f32 %v586, 1e-06
    %v843 = vadd.f32 %v587, 1e-06
    %v844 = vadd.f32 %v588, 1e-06
    %v845 = vadd.f32 %v589, 1e-06
    %v846 = vadd.f32 %v590, 1e-06
    %v847 = vadd.f32 %v591, 1e-06
    %v848 = vadd.f32 %v592, 1e-06
    %v849 = vadd.f32 %v593, 1e-06
    %v850 = vadd.f32 %v594, 1e-06
    %v851 = vadd.f32 %v595, 1e-06
    %v852 = vadd.f32 %v596, 1e-06
    %v853 = vadd.f32 %v597, 1e-06
    %v854 = vadd.f32 %v598, 1e-06
    %v855 = vadd.f32 %v599, 1e-06
    %v856 = vadd.f32 %v600, 1e-06
    %v857 = vadd.f32 %v601, 1e-06
    %v858 = vadd.f32 %v602, 1e-06
    %v859 = vadd.f32 %v603, 1e-06
    %v860 = vadd.f32 %v604, 1e-06
    %v861 = vadd.f32 %v605, 1e-06
    %v862 = vadd.f32 %v606, 1e-06
    %v863 = vadd.f32 %v607, 1e-06
    %v864 = vadd.f32 %v608, 1e-06
    %v865 = vadd.f32 %v609, 1e-06
    %v866 = vadd.f32 %v610, 1e-06
    %v867 = vadd.f32 %v611, 1e-06
    %v868 = vadd.f32 %v612, 1e-06
    %v869 = vadd.f32 %v613, 1e-06
    %v870 = vadd.f32 %v614, 1e-06
    %v871 = vadd.f32 %v615, 1e-06
    %v872 = vadd.f32 %v616, 1e-06
    %v873 = vadd.f32 %v617, 1e-06
    %v874 = vadd.f32 %v618, 1e-06
    %v875 = vadd.f32 %v619, 1e-06
    %v876 = vadd.f32 %v620, 1e-06
    %v877 = vadd.f32 %v621, 1e-06
    %v878 = vadd.f32 %v622, 1e-06
    %v879 = vadd.f32 %v623, 1e-06
    %v880 = vadd.f32 %v624, 1e-06
    %v881 = vadd.f32 %v625, 1e-06
    %v882 = vadd.f32 %v626, 1e-06
    %v883 = vadd.f32 %v627, 1e-06
    %v884 = vadd.f32 %v628, 1e-06
    %v885 = vadd.f32 %v629, 1e-06
    %v886 = vadd.f32 %v630, 1e-06
    %v887 = vadd.f32 %v631, 1e-06
    %v888 = vadd.f32 %v632, 1e-06
    %v889 = vadd.f32 %v633, 1e-06
    %v890 = vadd.f32 %v634, 1e-06
    %v891 = vadd.f32 %v635, 1e-06
    %v892 = vadd.f32 %v636, 1e-06
    %v893 = vadd.f32 %v637, 1e-06
    %v894 = vadd.f32 %v638, 1e-06
    %v895 = vadd.f32 %v639, 1e-06
    %v896 = vadd.f32 %v640, 1e-06
    %v897 = vadd.f32 %v641, 1e-06
    %v898 = vadd.f32 %v642, 1e-06
    %v899 = vadd.f32 %v643, 1e-06
    %v900 = vadd.f32 %v644, 1e-06
    %v901 = vadd.f32 %v645, 1e-06
    %v902 = vadd.f32 %v646, 1e-06
    %v903 = vadd.f32 %v647, 1e-06
    %v904 = vadd.f32 %v648, 1e-06
    %v905 = vadd.f32 %v649, 1e-06
    %v906 = vadd.f32 %v650, 1e-06
    %v907 = vadd.f32 %v651, 1e-06
    %v908 = vadd.f32 %v652, 1e-06
    %v909 = vadd.f32 %v653, 1e-06
    %v910 = vadd.f32 %v654, 1e-06
    %v911 = vadd.f32 %v655, 1e-06
    %v912 = vadd.f32 %v656, 1e-06
    %v913 = vadd.f32 %v657, 1e-06
    %v914 = vadd.f32 %v658, 1e-06
    %v915 = vadd.f32 %v659, 1e-06
    %v916 = vadd.f32 %v660, 1e-06
    %v917 = vadd.f32 %v661, 1e-06
    %v918 = vadd.f32 %v662, 1e-06
    %v919 = vadd.f32 %v663, 1e-06
    %v920 = vadd.f32 %v664, 1e-06
    %v921 = vadd.f32 %v665, 1e-06
    %v922 = vadd.f32 %v666, 1e-06
    %v923 = vadd.f32 %v667, 1e-06
    %v924 = vadd.f32 %v668, 1e-06
    %v925 = vadd.f32 %v669, 1e-06
    %v926 = vadd.f32 %v670, 1e-06
    %v927 = vadd.f32 %v671, 1e-06
    %v928 = vadd.f32 %v672, 1e-06
    %v929 = vadd.f32 %v673, 1e-06
    %v930 = vadd.f32 %v674, 1e-06
    %v931 = vadd.f32 %v675, 1e-06
    %v932 = vadd.f32 %v676, 1e-06
    %v933 = vadd.f32 %v677, 1e-06
    %v934 = vadd.f32 %v678, 1e-06
    %v935 = vadd.f32 %v679, 1e-06
    %v936 = vadd.f32 %v680, 1e-06
    %v937 = vadd.f32 %v681, 1e-06
    %v938 = vadd.f32 %v682, 1e-06
    %v939 = vadd.f32 %v683, 1e-06
    %v940 = vadd.f32 %v684, 1e-06
    %v941 = vadd.f32 %v685, 1e-06
    %v942 = vadd.f32 %v686, 1e-06
    %v943 = vadd.f32 %v687, 1e-06
    %v944 = vadd.f32 %v688, 1e-06
    %v945 = vadd.f32 %v689, 1e-06
    %v946 = vadd.f32 %v690, 1e-06
    %v947 = vadd.f32 %v691, 1e-06
    %v948 = vadd.f32 %v692, 1e-06
    %v949 = vadd.f32 %v693, 1e-06
    %v950 = vadd.f32 %v694, 1e-06
    %v951 = vadd.f32 %v695, 1e-06
    %v952 = vadd.f32 %v696, 1e-06
    %v953 = vadd.f32 %v697, 1e-06
    %v954 = vadd.f32 %v698, 1e-06
    %v955 = vadd.f32 %v699, 1e-06
    %v956 = vadd.f32 %v700, 1e-06
    %v957 = vadd.f32 %v701, 1e-06
    %v958 = vadd.f32 %v702, 1e-06
    %v959 = vadd.f32 %v703, 1e-06
    %v960 = vadd.f32 %v704, 1e-06
    %v961 = vadd.f32 %v705, 1e-06
    %v962 = vadd.f32 %v706, 1e-06
    %v963 = vadd.f32 %v707, 1e-06
    %v964 = vadd.f32 %v708, 1e-06
    %v965 = vadd.f32 %v709, 1e-06
    %v966 = vadd.f32 %v710, 1e-06
    %v967 = vadd.f32 %v711, 1e-06
    %v968 = vadd.f32 %v712, 1e-06
    %v969 = vadd.f32 %v713, 1e-06
    %v970 = vadd.f32 %v714, 1e-06
    %v971 = vadd.f32 %v715, 1e-06
    %v972 = vadd.f32 %v716, 1e-06
    %v973 = vadd.f32 %v717, 1e-06
    %v974 = vadd.f32 %v718, 1e-06
    %v975 = vadd.f32 %v719, 1e-06
    %v976 = vadd.f32 %v720, 1e-06
    %v977 = vadd.f32 %v721, 1e-06
    %v978 = vadd.f32 %v722, 1e-06
    %v979 = vadd.f32 %v723, 1e-06
    %v980 = vadd.f32 %v724, 1e-06
    %v981 = vadd.f32 %v725, 1e-06
    %v982 = vadd.f32 %v726, 1e-06
    %v983 = vadd.f32 %v727, 1e-06
    %v984 = vadd.f32 %v728, 1e-06
    %v985 = vadd.f32 %v729, 1e-06
    %v986 = vadd.f32 %v730, 1e-06
    %v987 = vadd.f32 %v731, 1e-06
    %v988 = vadd.f32 %v732, 1e-06
    %v989 = vadd.f32 %v733, 1e-06
    %v990 = vadd.f32 %v734, 1e-06
    %v991 = vadd.f32 %v735, 1e-06
    %v992 = vadd.f32 %v736, 1e-06
    %v993 = vadd.f32 %v737, 1e-06
    %v994 = vadd.f32 %v738, 1e-06
    %v995 = vadd.f32 %v739, 1e-06
    %v996 = vadd.f32 %v740, 1e-06
    %v997 = vadd.f32 %v741, 1e-06
    %v998 = vadd.f32 %v742, 1e-06
    %v999 = vadd.f32 %v743, 1e-06
    %v1000 = vadd.f32 %v744, 1e-06
    %v1001 = vadd.f32 %v745, 1e-06
    %v1002 = vadd.f32 %v746, 1e-06
    %v1003 = vadd.f32 %v747, 1e-06
    %v1004 = vadd.f32 %v748, 1e-06
    %v1005 = vadd.f32 %v749, 1e-06
    %v1006 = vadd.f32 %v750, 1e-06
    %v1007 = vadd.f32 %v751, 1e-06
    %v1008 = vadd.f32 %v752, 1e-06
    %v1009 = vadd.f32 %v753, 1e-06
    %v1010 = vadd.f32 %v754, 1e-06
    %v1011 = vadd.f32 %v755, 1e-06
    %v1012 = vadd.f32 %v756, 1e-06
    %v1013 = vadd.f32 %v757, 1e-06
    %v1014 = vadd.f32 %v758, 1e-06
    %v1015 = vadd.f32 %v759, 1e-06
    %v1016 = vadd.f32 %v760, 1e-06
    %v1017 = vadd.f32 %v761, 1e-06
    %v1018 = vadd.f32 %v762, 1e-06
    %v1019 = vadd.f32 %v763, 1e-06
    %v1020 = vadd.f32 %v764, 1e-06
    %v1021 = vadd.f32 %v765, 1e-06
    %v1022 = vadd.f32 %v766, 1e-06
    %v1023 = vadd.f32 %v767, 1e-06
    %v1024 = vadd.f32 %v768, 1e-06
    %v1025 = vadd.f32 %v769, 1e-06
    %v1026 = vadd.f32 %v770, 1e-06
    %v1027 = vadd.f32 %v771, 1e-06
    %v1028 = vadd.f32 %v772, 1e-06
    %v1029 = vadd.f32 %v773, 1e-06
    %v1030 = vadd.f32 %v774, 1e-06
    %v1031 = vadd.f32 %v775, 1e-06
    %v1032 = vadd.f32 %v776, 1e-06
    %v1033 = vadd.f32 %v777, 1e-06
    %v1034 = vadd.f32 %v778, 1e-06
    %v1035 = vadd.f32 %v779, 1e-06
    %v1036 = vadd.f32 %v780, 1e-06
    %v1037 = vadd.f32 %v781, 1e-06
    %v1038 = vadd.f32 %v782, 1e-06
    %v1039 = vadd.f32 %v783, 1e-06
    %v1040 = vadd.f32 %v784, 1e-06
    %v1041 = vadd.f32 %v785, 1e-06
    %v1042 = vadd.f32 %v786, 1e-06
    %v1043 = vadd.f32 %v787, 1e-06
    %v1044 = vadd.f32 %v788, 1e-06
    %v1045 = vadd.f32 %v789, 1e-06
    %v1046 = vadd.f32 %v790, 1e-06
    %v1047 = vadd.f32 %v791, 1e-06
    %v1048 = vadd.f32 %v792, 1e-06
    %v1049 = vadd.f32 %v793, 1e-06
    %v1050 = vadd.f32 %v794, 1e-06
    %v1051 = vadd.f32 %v795, 1e-06
    %v1052 = vadd.f32 %v796, 1e-06
    %v1053 = vadd.f32 %v797, 1e-06
    %v1054 = vadd.f32 %v798, 1e-06
    %v1055 = vadd.f32 %v799, 1e-06
    %v1056 = vadd.f32 %v800, 1e-06
    %v1057 = vadd.f32 %v801, 1e-06
    %v1058 = vadd.f32 %v802, 1e-06
    %v1059 = vadd.f32 %v803, 1e-06
    %v1060 = vadd.f32 %v804, 1e-06
    %v1061 = vadd.f32 %v805, 1e-06
    %v1062 = vadd.f32 %v806, 1e-06
    %v1063 = vadd.f32 %v807, 1e-06
    %v1064 = vadd.f32 %v808, 1e-06
    %v1065 = vadd.f32 %v809, 1e-06
    %v1066 = vadd.f32 %v810, 1e-06
    %v1067 = vadd.f32 %v811, 1e-06
    %v1068 = vadd.f32 %v812, 1e-06
    %v1069 = vadd.f32 %v813, 1e-06
    %v1070 = vadd.f32 %v814, 1e-06
    %v1071 = vadd.f32 %v815, 1e-06
    %v1072 = vadd.f32 %v816, 1e-06
    %v1073 = vadd.f32 %v817, 1e-06
    %v1074 = vadd.f32 %v818, 1e-06
    %v1075 = vmul.f32 %v819, %v819
    %v1076 = vmul.f32 %v820, %v820
    %v1077 = vmul.f32 %v821, %v821
    %v1078 = vmul.f32 %v822, %v822
    %v1079 = vmul.f32 %v823, %v823
    %v1080 = vmul.f32 %v824, %v824
    %v1081 = vmul.f32 %v825, %v825
    %v1082 = vmul.f32 %v826, %v826
    %v1083 = vmul.f32 %v827, %v827
    %v1084 = vmul.f32 %v828, %v828
    %v1085 = vmul.f32 %v829, %v829
    %v1086 = vmul.f32 %v830, %v830
    %v1087 = vmul.f32 %v831, %v831
    %v1088 = vmul.f32 %v832, %v832
    %v1089 = vmul.f32 %v833, %v833
    %v1090 = vmul.f32 %v834, %v834
    %v1091 = vmul.f32 %v835, %v835
    %v1092 = vmul.f32 %v836, %v836
    %v1093 = vmul.f32 %v837, %v837
    %v1094 = vmul.f32 %v838, %v838
    %v1095 = vmul.f32 %v839, %v839
    %v1096 = vmul.f32 %v840, %v840
    %v1097 = vmul.f32 %v841, %v841
    %v1098 = vmul.f32 %v842, %v842
    %v1099 = vmul.f32 %v843, %v843
    %v1100 = vmul.f32 %v844, %v844
    %v1101 = vmul.f32 %v845, %v845
    %v1102 = vmul.f32 %v846, %v846
    %v1103 = vmul.f32 %v847, %v847
    %v1104 = vmul.f32 %v848, %v848
    %v1105 = vmul.f32 %v849, %v849
    %v1106 = vmul.f32 %v850, %v850
    %v1107 = vmul.f32 %v851, %v851
    %v1108 = vmul.f32 %v852, %v852
    %v1109 = vmul.f32 %v853, %v853
    %v1110 = vmul.f32 %v854, %v854
    %v1111 = vmul.f32 %v855, %v855
    %v1112 = vmul.f32 %v856, %v856
    %v1113 = vmul.f32 %v857, %v857
    %v1114 = vmul.f32 %v858, %v858
    %v1115 = vmul.f32 %v859, %v859
    %v1116 = vmul.f32 %v860, %v860
    %v1117 = vmul.f32 %v861, %v861
    %v1118 = vmul.f32 %v862, %v862
    %v1119 = vmul.f32 %v863, %v863
    %v1120 = vmul.f32 %v864, %v864
    %v1121 = vmul.f32 %v865, %v865
    %v1122 = vmul.f32 %v866, %v866
    %v1123 = vmul.f32 %v867, %v867
    %v1124 = vmul.f32 %v868, %v868
    %v1125 = vmul.f32 %v869, %v869
    %v1126 = vmul.f32 %v870, %v870
    %v1127 = vmul.f32 %v871, %v871
    %v1128 = vmul.f32 %v872, %v872
    %v1129 = vmul.f32 %v873, %v873
    %v1130 = vmul.f32 %v874, %v874
    %v1131 = vmul.f32 %v875, %v875
    %v1132 = vmul.f32 %v876, %v876
    %v1133 = vmul.f32 %v877, %v877
    %v1134 = vmul.f32 %v878, %v878
    %v1135 = vmul.f32 %v879, %v879
    %v1136 = vmul.f32 %v880, %v880
    %v1137 = vmul.f32 %v881, %v881
    %v1138 = vmul.f32 %v882, %v882
    %v1139 = vmul.f32 %v883, %v883
    %v1140 = vmul.f32 %v884, %v884
    %v1141 = vmul.f32 %v885, %v885
    %v1142 = vmul.f32 %v886, %v886
    %v1143 = vmul.f32 %v887, %v887
    %v1144 = vmul.f32 %v888, %v888
    %v1145 = vmul.f32 %v889, %v889
    %v1146 = vmul.f32 %v890, %v890
    %v1147 = vmul.f32 %v891, %v891
    %v1148 = vmul.f32 %v892, %v892
    %v1149 = vmul.f32 %v893, %v893
    %v1150 = vmul.f32 %v894, %v894
    %v1151 = vmul.f32 %v895, %v895
    %v1152 = vmul.f32 %v896, %v896
    %v1153 = vmul.f32 %v897, %v897
    %v1154 = vmul.f32 %v898, %v898
    %v1155 = vmul.f32 %v899, %v899
    %v1156 = vmul.f32 %v900, %v900
    %v1157 = vmul.f32 %v901, %v901
    %v1158 = vmul.f32 %v902, %v902
    %v1159 = vmul.f32 %v903, %v903
    %v1160 = vmul.f32 %v904, %v904
    %v1161 = vmul.f32 %v905, %v905
    %v1162 = vmul.f32 %v906, %v906
    %v1163 = vmul.f32 %v907, %v907
    %v1164 = vmul.f32 %v908, %v908
    %v1165 = vmul.f32 %v909, %v909
    %v1166 = vmul.f32 %v910, %v910
    %v1167 = vmul.f32 %v911, %v911
    %v1168 = vmul.f32 %v912, %v912
    %v1169 = vmul.f32 %v913, %v913
    %v1170 = vmul.f32 %v914, %v914
    %v1171 = vmul.f32 %v915, %v915
    %v1172 = vmul.f32 %v916, %v916
    %v1173 = vmul.f32 %v917, %v917
    %v1174 = vmul.f32 %v918, %v918
    %v1175 = vmul.f32 %v919, %v919
    %v1176 = vmul.f32 %v920, %v920
    %v1177 = vmul.f32 %v921, %v921
    %v1178 = vmul.f32 %v922, %v922
    %v1179 = vmul.f32 %v923, %v923
    %v1180 = vmul.f32 %v924, %v924
    %v1181 = vmul.f32 %v925, %v925
    %v1182 = vmul.f32 %v926, %v926
    %v1183 = vmul.f32 %v927, %v927
    %v1184 = vmul.f32 %v928, %v928
    %v1185 = vmul.f32 %v929, %v929
    %v1186 = vmul.f32 %v930, %v930
    %v1187 = vmul.f32 %v931, %v931
    %v1188 = vmul.f32 %v932, %v932
    %v1189 = vmul.f32 %v933, %v933
    %v1190 = vmul.f32 %v934, %v934
    %v1191 = vmul.f32 %v935, %v935
    %v1192 = vmul.f32 %v936, %v936
    %v1193 = vmul.f32 %v937, %v937
    %v1194 = vmul.f32 %v938, %v938
    %v1195 = vmul.f32 %v939, %v939
    %v1196 = vmul.f32 %v940, %v940
    %v1197 = vmul.f32 %v941, %v941
    %v1198 = vmul.f32 %v942, %v942
    %v1199 = vmul.f32 %v943, %v943
    %v1200 = vmul.f32 %v944, %v944
    %v1201 = vmul.f32 %v945, %v945
    %v1202 = vmul.f32 %v946, %v946
    %v1203 = vmul.f32 %v947, %v947
    %v1204 = vmul.f32 %v948, %v948
    %v1205 = vmul.f32 %v949, %v949
    %v1206 = vmul.f32 %v950, %v950
    %v1207 = vmul.f32 %v951, %v951
    %v1208 = vmul.f32 %v952, %v952
    %v1209 = vmul.f32 %v953, %v953
    %v1210 = vmul.f32 %v954, %v954
    %v1211 = vmul.f32 %v955, %v955
    %v1212 = vmul.f32 %v956, %v956
    %v1213 = vmul.f32 %v957, %v957
    %v1214 = vmul.f32 %v958, %v958
    %v1215 = vmul.f32 %v959, %v959
    %v1216 = vmul.f32 %v960, %v960
    %v1217 = vmul.f32 %v961, %v961
    %v1218 = vmul.f32 %v962, %v962
    %v1219 = vmul.f32 %v963, %v963
    %v1220 = vmul.f32 %v964, %v964
    %v1221 = vmul.f32 %v965, %v965
    %v1222 = vmul.f32 %v966, %v966
    %v1223 = vmul.f32 %v967, %v967
    %v1224 = vmul.f32 %v968, %v968
    %v1225 = vmul.f32 %v969, %v969
    %v1226 = vmul.f32 %v970, %v970
    %v1227 = vmul.f32 %v971, %v971
    %v1228 = vmul.f32 %v972, %v972
    %v1229 = vmul.f32 %v973, %v973
    %v1230 = vmul.f32 %v974, %v974
    %v1231 = vmul.f32 %v975, %v975
    %v1232 = vmul.f32 %v976, %v976
    %v1233 = vmul.f32 %v977, %v977
    %v1234 = vmul.f32 %v978, %v978
    %v1235 = vmul.f32 %v979, %v979
    %v1236 = vmul.f32 %v980, %v980
    %v1237 = vmul.f32 %v981, %v981
    %v1238 = vmul.f32 %v982, %v982
    %v1239 = vmul.f32 %v983, %v983
    %v1240 = vmul.f32 %v984, %v984
    %v1241 = vmul.f32 %v985, %v985
    %v1242 = vmul.f32 %v986, %v986
    %v1243 = vmul.f32 %v987, %v987
    %v1244 = vmul.f32 %v988, %v988
    %v1245 = vmul.f32 %v989, %v989
    %v1246 = vmul.f32 %v990, %v990
    %v1247 = vmul.f32 %v991, %v991
    %v1248 = vmul.f32 %v992, %v992
    %v1249 = vmul.f32 %v993, %v993
    %v1250 = vmul.f32 %v994, %v994
    %v1251 = vmul.f32 %v995, %v995
    %v1252 = vmul.f32 %v996, %v996
    %v1253 = vmul.f32 %v997, %v997
    %v1254 = vmul.f32 %v998, %v998
    %v1255 = vmul.f32 %v999, %v999
    %v1256 = vmul.f32 %v1000, %v1000
    %v1257 = vmul.f32 %v1001, %v1001
    %v1258 = vmul.f32 %v1002, %v1002
    %v1259 = vmul.f32 %v1003, %v1003
    %v1260 = vmul.f32 %v1004, %v1004
    %v1261 = vmul.f32 %v1005, %v1005
    %v1262 = vmul.f32 %v1006, %v1006
    %v1263 = vmul.f32 %v1007, %v1007
    %v1264 = vmul.f32 %v1008, %v1008
    %v1265 = vmul.f32 %v1009, %v1009
    %v1266 = vmul.f32 %v1010, %v1010
    %v1267 = vmul.f32 %v1011, %v1011
    %v1268 = vmul.f32 %v1012, %v1012
    %v1269 = vmul.f32 %v1013, %v1013
    %v1270 = vmul.f32 %v1014, %v1014
    %v1271 = vmul.f32 %v1015, %v1015
    %v1272 = vmul.f32 %v1016, %v1016
    %v1273 = vmul.f32 %v1017, %v1017
    %v1274 = vmul.f32 %v1018, %v1018
    %v1275 = vmul.f32 %v1019, %v1019
    %v1276 = vmul.f32 %v1020, %v1020
    %v1277 = vmul.f32 %v1021, %v1021
    %v1278 = vmul.f32 %v1022, %v1022
    %v1279 = vmul.f32 %v1023, %v1023
    %v1280 = vmul.f32 %v1024, %v1024
    %v1281 = vmul.f32 %v1025, %v1025
    %v1282 = vmul.f32 %v1026, %v1026
    %v1283 = vmul.f32 %v1027, %v1027
    %v1284 = vmul.f32 %v1028, %v1028
    %v1285 = vmul.f32 %v1029, %v1029
    %v1286 = vmul.f32 %v1030, %v1030
    %v1287 = vmul.f32 %v1031, %v1031
    %v1288 = vmul.f32 %v1032, %v1032
    %v1289 = vmul.f32 %v1033, %v1033
    %v1290 = vmul.f32 %v1034, %v1034
    %v1291 = vmul.f32 %v1035, %v1035
    %v1292 = vmul.f32 %v1036, %v1036
    %v1293 = vmul.f32 %v1037, %v1037
    %v1294 = vmul.f32 %v1038, %v1038
    %v1295 = vmul.f32 %v1039, %v1039
    %v1296 = vmul.f32 %v1040, %v1040
    %v1297 = vmul.f32 %v1041, %v1041
    %v1298 = vmul.f32 %v1042, %v1042
    %v1299 = vmul.f32 %v1043, %v1043
    %v1300 = vmul.f32 %v1044, %v1044
    %v1301 = vmul.f32 %v1045, %v1045
    %v1302 = vmul.f32 %v1046, %v1046
    %v1303 = vmul.f32 %v1047, %v1047
    %v1304 = vmul.f32 %v1048, %v1048
    %v1305 = vmul.f32 %v1049, %v1049
    %v1306 = vmul.f32 %v1050, %v1050
    %v1307 = vmul.f32 %v1051, %v1051
    %v1308 = vmul.f32 %v1052, %v1052
    %v1309 = vmul.f32 %v1053, %v1053
    %v1310 = vmul.f32 %v1054, %v1054
    %v1311 = vmul.f32 %v1055, %v1055
    %v1312 = vmul.f32 %v1056, %v1056
    %v1313 = vmul.f32 %v1057, %v1057
    %v1314 = vmul.f32 %v1058, %v1058
    %v1315 = vmul.f32 %v1059, %v1059
    %v1316 = vmul.f32 %v1060, %v1060
    %v1317 = vmul.f32 %v1061, %v1061
    %v1318 = vmul.f32 %v1062, %v1062
    %v1319 = vmul.f32 %v1063, %v1063
    %v1320 = vmul.f32 %v1064, %v1064
    %v1321 = vmul.f32 %v1065, %v1065
    %v1322 = vmul.f32 %v1066, %v1066
    %v1323 = vmul.f32 %v1067, %v1067
    %v1324 = vmul.f32 %v1068, %v1068
    %v1325 = vmul.f32 %v1069, %v1069
    %v1326 = vmul.f32 %v1070, %v1070
    %v1327 = vmul.f32 %v1071, %v1071
    %v1328 = vmul.f32 %v1072, %v1072
    %v1329 = vmul.f32 %v1073, %v1073
    %v1330 = vmul.f32 %v1074, %v1074
    %v1331 = vadd.f32 %v1075, %v1077
    %v1332 = vadd.f32 %v1331, %v1079
    %v1333 = vadd.f32 %v1332, %v1081
    %v1334 = vadd.f32 %v1333, %v1083
    %v1335 = vadd.f32 %v1334, %v1085
    %v1336 = vadd.f32 %v1335, %v1087
    %v1337 = vadd.f32 %v1336, %v1089
    %v1338 = vadd.f32 %v1337, %v1091
    %v1339 = vadd.f32 %v1338, %v1093
    %v1340 = vadd.f32 %v1339, %v1095
    %v1341 = vadd.f32 %v1340, %v1097
    %v1342 = vadd.f32 %v1341, %v1099
    %v1343 = vadd.f32 %v1342, %v1101
    %v1344 = vadd.f32 %v1343, %v1103
    %v1345 = vadd.f32 %v1344, %v1105
    %v1346 = vadd.f32 %v1345, %v1107
    %v1347 = vadd.f32 %v1346, %v1109
    %v1348 = vadd.f32 %v1347, %v1111
    %v1349 = vadd.f32 %v1348, %v1113
    %v1350 = vadd.f32 %v1349, %v1115
    %v1351 = vadd.f32 %v1350, %v1117
    %v1352 = vadd.f32 %v1351, %v1119
    %v1353 = vadd.f32 %v1352, %v1121
    %v1354 = vadd.f32 %v1353, %v1123
    %v1355 = vadd.f32 %v1354, %v1125
    %v1356 = vadd.f32 %v1355, %v1127
    %v1357 = vadd.f32 %v1356, %v1129
    %v1358 = vadd.f32 %v1357, %v1131
    %v1359 = vadd.f32 %v1358, %v1133
    %v1360 = vadd.f32 %v1359, %v1135
    %v1361 = vadd.f32 %v1360, %v1137
    %v1362 = vadd.f32 %v1361, %v1139
    %v1363 = vadd.f32 %v1362, %v1141
    %v1364 = vadd.f32 %v1363, %v1143
    %v1365 = vadd.f32 %v1364, %v1145
    %v1366 = vadd.f32 %v1365, %v1147
    %v1367 = vadd.f32 %v1366, %v1149
    %v1368 = vadd.f32 %v1367, %v1151
    %v1369 = vadd.f32 %v1368, %v1153
    %v1370 = vadd.f32 %v1369, %v1155
    %v1371 = vadd.f32 %v1370, %v1157
    %v1372 = vadd.f32 %v1371, %v1159
    %v1373 = vadd.f32 %v1372, %v1161
    %v1374 = vadd.f32 %v1373, %v1163
    %v1375 = vadd.f32 %v1374, %v1165
    %v1376 = vadd.f32 %v1375, %v1167
    %v1377 = vadd.f32 %v1376, %v1169
    %v1378 = vadd.f32 %v1377, %v1171
    %v1379 = vadd.f32 %v1378, %v1173
    %v1380 = vadd.f32 %v1379, %v1175
    %v1381 = vadd.f32 %v1380, %v1177
    %v1382 = vadd.f32 %v1381, %v1179
    %v1383 = vadd.f32 %v1382, %v1181
    %v1384 = vadd.f32 %v1383, %v1183
    %v1385 = vadd.f32 %v1384, %v1185
    %v1386 = vadd.f32 %v1385, %v1187
    %v1387 = vadd.f32 %v1386, %v1189
    %v1388 = vadd.f32 %v1387, %v1191
    %v1389 = vadd.f32 %v1388, %v1193
    %v1390 = vadd.f32 %v1389, %v1195
    %v1391 = vadd.f32 %v1390, %v1197
    %v1392 = vadd.f32 %v1391, %v1199
    %v1393 = vadd.f32 %v1392, %v1201
    %v1394 = vadd.f32 %v1393, %v1203
    %v1395 = vadd.f32 %v1394, %v1205
    %v1396 = vadd.f32 %v1395, %v1207
    %v1397 = vadd.f32 %v1396, %v1209
    %v1398 = vadd.f32 %v1397, %v1211
    %v1399 = vadd.f32 %v1398, %v1213
    %v1400 = vadd.f32 %v1399, %v1215
    %v1401 = vadd.f32 %v1400, %v1217
    %v1402 = vadd.f32 %v1401, %v1219
    %v1403 = vadd.f32 %v1402, %v1221
    %v1404 = vadd.f32 %v1403, %v1223
    %v1405 = vadd.f32 %v1404, %v1225
    %v1406 = vadd.f32 %v1405, %v1227
    %v1407 = vadd.f32 %v1406, %v1229
    %v1408 = vadd.f32 %v1407, %v1231
    %v1409 = vadd.f32 %v1408, %v1233
    %v1410 = vadd.f32 %v1409, %v1235
    %v1411 = vadd.f32 %v1410, %v1237
    %v1412 = vadd.f32 %v1411, %v1239
    %v1413 = vadd.f32 %v1412, %v1241
    %v1414 = vadd.f32 %v1413, %v1243
    %v1415 = vadd.f32 %v1414, %v1245
    %v1416 = vadd.f32 %v1415, %v1247
    %v1417 = vadd.f32 %v1416, %v1249
    %v1418 = vadd.f32 %v1417, %v1251
    %v1419 = vadd.f32 %v1418, %v1253
    %v1420 = vadd.f32 %v1419, %v1255
    %v1421 = vadd.f32 %v1420, %v1257
    %v1422 = vadd.f32 %v1421, %v1259
    %v1423 = vadd.f32 %v1422, %v1261
    %v1424 = vadd.f32 %v1423, %v1263
    %v1425 = vadd.f32 %v1424, %v1265
    %v1426 = vadd.f32 %v1425, %v1267
    %v1427 = vadd.f32 %v1426, %v1269
    %v1428 = vadd.f32 %v1427, %v1271
    %v1429 = vadd.f32 %v1428, %v1273
    %v1430 = vadd.f32 %v1429, %v1275
    %v1431 = vadd.f32 %v1430, %v1277
    %v1432 = vadd.f32 %v1431, %v1279
    %v1433 = vadd.f32 %v1432, %v1281
    %v1434 = vadd.f32 %v1433, %v1283
    %v1435 = vadd.f32 %v1434, %v1285
    %v1436 = vadd.f32 %v1435, %v1287
    %v1437 = vadd.f32 %v1436, %v1289
    %v1438 = vadd.f32 %v1437, %v1291
    %v1439 = vadd.f32 %v1438, %v1293
    %v1440 = vadd.f32 %v1439, %v1295
    %v1441 = vadd.f32 %v1440, %v1297
    %v1442 = vadd.f32 %v1441, %v1299
    %v1443 = vadd.f32 %v1442, %v1301
    %v1444 = vadd.f32 %v1443, %v1303
    %v1445 = vadd.f32 %v1444, %v1305
    %v1446 = vadd.f32 %v1445, %v1307
    %v1447 = vadd.f32 %v1446, %v1309
    %v1448 = vadd.f32 %v1447, %v1311
    %v1449 = vadd.f32 %v1448, %v1313
    %v1450 = vadd.f32 %v1449, %v1315
    %v1451 = vadd.f32 %v1450, %v1317
    %v1452 = vadd.f32 %v1451, %v1319
    %v1453 = vadd.f32 %v1452, %v1321
    %v1454 = vadd.f32 %v1453, %v1323
    %v1455 = vadd.f32 %v1454, %v1325
    %v1456 = vadd.f32 %v1455, %v1327
    %v1457 = vadd.f32 %v1456, %v1329
    %v1458 = vadd.f32 %v1076, %v1078
    %v1459 = vadd.f32 %v1458, %v1080
    %v1460 = vadd.f32 %v1459, %v1082
    %v1461 = vadd.f32 %v1460, %v1084
    %v1462 = vadd.f32 %v1461, %v1086
    %v1463 = vadd.f32 %v1462, %v1088
    %v1464 = vadd.f32 %v1463, %v1090
    %v1465 = vadd.f32 %v1464, %v1092
    %v1466 = vadd.f32 %v1465, %v1094
    %v1467 = vadd.f32 %v1466, %v1096
    %v1468 = vadd.f32 %v1467, %v1098
    %v1469 = vadd.f32 %v1468, %v1100
    %v1470 = vadd.f32 %v1469, %v1102
    %v1471 = vadd.f32 %v1470, %v1104
    %v1472 = vadd.f32 %v1471, %v1106
    %v1473 = vadd.f32 %v1472, %v1108
    %v1474 = vadd.f32 %v1473, %v1110
    %v1475 = vadd.f32 %v1474, %v1112
    %v1476 = vadd.f32 %v1475, %v1114
    %v1477 = vadd.f32 %v1476, %v1116
    %v1478 = vadd.f32 %v1477, %v1118
    %v1479 = vadd.f32 %v1478, %v1120
    %v1480 = vadd.f32 %v1479, %v1122
    %v1481 = vadd.f32 %v1480, %v1124
    %v1482 = vadd.f32 %v1481, %v1126
    %v1483 = vadd.f32 %v1482, %v1128
    %v1484 = vadd.f32 %v1483, %v1130
    %v1485 = vadd.f32 %v1484, %v1132
    %v1486 = vadd.f32 %v1485, %v1134
    %v1487 = vadd.f32 %v1486, %v1136
    %v1488 = vadd.f32 %v1487, %v1138
    %v1489 = vadd.f32 %v1488, %v1140
    %v1490 = vadd.f32 %v1489, %v1142
    %v1491 = vadd.f32 %v1490, %v1144
    %v1492 = vadd.f32 %v1491, %v1146
    %v1493 = vadd.f32 %v1492, %v1148
    %v1494 = vadd.f32 %v1493, %v1150
    %v1495 = vadd.f32 %v1494, %v1152
    %v1496 = vadd.f32 %v1495, %v1154
    %v1497 = vadd.f32 %v1496, %v1156
    %v1498 = vadd.f32 %v1497, %v1158
    %v1499 = vadd.f32 %v1498, %v1160
    %v1500 = vadd.f32 %v1499, %v1162
    %v1501 = vadd.f32 %v1500, %v1164
    %v1502 = vadd.f32 %v1501, %v1166
    %v1503 = vadd.f32 %v1502, %v1168
    %v1504 = vadd.f32 %v1503, %v1170
    %v1505 = vadd.f32 %v1504, %v1172
    %v1506 = vadd.f32 %v1505, %v1174
    %v1507 = vadd.f32 %v1506, %v1176
    %v1508 = vadd.f32 %v1507, %v1178
    %v1509 = vadd.f32 %v1508, %v1180
    %v1510 = vadd.f32 %v1509, %v1182
    %v1511 = vadd.f32 %v1510, %v1184
    %v1512 = vadd.f32 %v1511, %v1186
    %v1513 = vadd.f32 %v1512, %v1188
    %v1514 = vadd.f32 %v1513, %v1190
    %v1515 = vadd.f32 %v1514, %v1192
    %v1516 = vadd.f32 %v1515, %v1194
    %v1517 = vadd.f32 %v1516, %v1196
    %v1518 = vadd.f32 %v1517, %v1198
    %v1519 = vadd.f32 %v1518, %v1200
    %v1520 = vadd.f32 %v1519, %v1202
    %v1521 = vadd.f32 %v1520, %v1204
    %v1522 = vadd.f32 %v1521, %v1206
    %v1523 = vadd.f32 %v1522, %v1208
    %v1524 = vadd.f32 %v1523, %v1210
    %v1525 = vadd.f32 %v1524, %v1212
    %v1526 = vadd.f32 %v1525, %v1214
    %v1527 = vadd.f32 %v1526, %v1216
    %v1528 = vadd.f32 %v1527, %v1218
    %v1529 = vadd.f32 %v1528, %v1220
    %v1530 = vadd.f32 %v1529, %v1222
    %v1531 = vadd.f32 %v1530, %v1224
    %v1532 = vadd.f32 %v1531, %v1226
    %v1533 = vadd.f32 %v1532, %v1228
    %v1534 = vadd.f32 %v1533, %v1230
    %v1535 = vadd.f32 %v1534, %v1232
    %v1536 = vadd.f32 %v1535, %v1234
    %v1537 = vadd.f32 %v1536, %v1236
    %v1538 = vadd.f32 %v1537, %v1238
    %v1539 = vadd.f32 %v1538, %v1240
    %v1540 = vadd.f32 %v1539, %v1242
    %v1541 = vadd.f32 %v1540, %v1244
    %v1542 = vadd.f32 %v1541, %v1246
    %v1543 = vadd.f32 %v1542, %v1248
    %v1544 = vadd.f32 %v1543, %v1250
    %v1545 = vadd.f32 %v1544, %v1252
    %v1546 = vadd.f32 %v1545, %v1254
    %v1547 = vadd.f32 %v1546, %v1256
    %v1548 = vadd.f32 %v1547, %v1258
    %v1549 = vadd.f32 %v1548, %v1260
    %v1550 = vadd.f32 %v1549, %v1262
    %v1551 = vadd.f32 %v1550, %v1264
    %v1552 = vadd.f32 %v1551, %v1266
    %v1553 = vadd.f32 %v1552, %v1268
    %v1554 = vadd.f32 %v1553, %v1270
    %v1555 = vadd.f32 %v1554, %v1272
    %v1556 = vadd.f32 %v1555, %v1274
    %v1557 = vadd.f32 %v1556, %v1276
    %v1558 = vadd.f32 %v1557, %v1278
    %v1559 = vadd.f32 %v1558, %v1280
    %v1560 = vadd.f32 %v1559, %v1282
    %v1561 = vadd.f32 %v1560, %v1284
    %v1562 = vadd.f32 %v1561, %v1286
    %v1563 = vadd.f32 %v1562, %v1288
    %v1564 = vadd.f32 %v1563, %v1290
    %v1565 = vadd.f32 %v1564, %v1292
    %v1566 = vadd.f32 %v1565, %v1294
    %v1567 = vadd.f32 %v1566, %v1296
    %v1568 = vadd.f32 %v1567, %v1298
    %v1569 = vadd.f32 %v1568, %v1300
    %v1570 = vadd.f32 %v1569, %v1302
    %v1571 = vadd.f32 %v1570, %v1304
    %v1572 = vadd.f32 %v1571, %v1306
    %v1573 = vadd.f32 %v1572, %v1308
    %v1574 = vadd.f32 %v1573, %v1310
    %v1575 = vadd.f32 %v1574, %v1312
    %v1576 = vadd.f32 %v1575, %v1314
    %v1577 = vadd.f32 %v1576, %v1316
    %v1578 = vadd.f32 %v1577, %v1318
    %v1579 = vadd.f32 %v1578, %v1320
    %v1580 = vadd.f32 %v1579, %v1322
    %v1581 = vadd.f32 %v1580, %v1324
    %v1582 = vadd.f32 %v1581, %v1326
    %v1583 = vadd.f32 %v1582, %v1328
    %v1584 = vadd.f32 %v1583, %v1330
    %v1585 = vadd.f32 %v1457, 0.0
    %v1586 = vadd.f32 %v1584, 0.0
    %v1587 = vld [vmem:[#allocation7] sm:$0xff]
    %v1588 = vld [vmem:[#allocation7 + $0x8] sm:$0xff]
    %v1589 = vadd.f32 %v1587, %v1585
    %v1590 = vadd.f32 %v1588, %v1586
    %1591 = vst [vmem:[#allocation7] sm:$0xff] %v1589
    %1592 = vst [vmem:[#allocation7 + $0x8] sm:$0xff] %v1590
    // Predicated region
    $region22: #{tpu_custom_call.1} parent=1 // pred_check
      _
    $region23: #{tpu_custom_call.1} parent=1 // pred_check_branch
      %1594 = sbr.rel (0) target = $region25
    $region24: #{tpu_custom_call.1} parent=1 // pred_region
      %s1596 = ssub.s32 256, 256
      %1597 = vsyncadd [#allocation4], %s1596
      %s1599 = sshll.u32 [#allocation7], 4
      %s1600 = int_to_ptr.vmem [resolvable:$true] %s1599
      %1602 = dma.vmem_to_hbm [thread:$0]  %s1600, 256, %s2, [#allocation4]
    $region25: #{tpu_custom_call.1} parent=1 // pred_fallthru
      _
    // Predicated region
    $region26: #{tpu_custom_call.1} parent=1 // pred_check
      _
    $region27: #{tpu_custom_call.1} parent=1 // pred_check_branch
      %1604 = sbr.rel (0) target = $region29
    $region28: #{tpu_custom_call.1} parent=1 // pred_region
      %1605 = dma.done [#allocation4], 256
    $region29: #{tpu_custom_call.1} parent=1 // pred_fallthru
      _
    %1606 = vsyncpa [#allocation3], 1
    %1607 = vsyncpa [#allocation6], 1
    %1608 = vsyncpa [#allocation4], 1

</llo_original>
